<compile_context>
chip_gen: v7x
topology: tpu7x:2x2x1
jax: 0.10.0
libtpu: 0.0.40
codegen_flags: <defaults>
</compile_context>

<pallas_src>
import functools

import jax
import jax.numpy as jnp
from jax.experimental import pallas as pl
from jax.experimental.pallas import tpu as pltpu


def _make_divisible(v, divisor=8, min_value=None):
    if min_value is None:
        min_value = divisor
    new_v = max(min_value, int(v + divisor / 2) // divisor * divisor)
    if new_v < 0.9 * v:
        new_v += divisor
    return int(new_v)


def _hswish(x):
    # x * relu6(x + 3) / 6
    return x * (jnp.clip(x + 3.0, 0.0, 6.0) * (1.0 / 6.0))


def _stack_rows(rows):
    """Stack a list of (1, L) rows into (n, L) using broadcast + select.

    Avoids sub-(8,128)-tile sublane concatenation inside the kernel."""
    n = len(rows)
    lanes = rows[0].shape[-1]
    if n == 1:
        return rows[0]
    sel = jax.lax.broadcasted_iota(jnp.int32, (n, lanes), 0)
    out = jnp.broadcast_to(rows[0], (n, lanes))
    for i in range(1, n):
        out = jnp.where(sel == i, jnp.broadcast_to(rows[i], (n, lanes)), out)
    return out


# ------------------------------ Pallas kernel ---------------------------------
def inverted_residual_kernel(
    x_ref,                     # (N*H, W*Ci)  f32
    w1_ref,                    # (W*Ci, W*Ce) block-diag expansion weights (mxu dtype)
    hmask_ref,                 # (K, N*H, W*Ce) f32 0/1 h-boundary masks per h-tap
    wtap_ref,                  # (K*K, W*Ce) f32 per-tap lane weights (w-mask folded in)
    wse1_ref, wse2_ref,        # duplicated SE weights (mxu dtype)
    w3_ref,                    # (W*Ce, W*Co) block-diag projection weights (mxu dtype)
    ge_ref, go_ref,            # (lanes, lanes) f32 BN channel sum/scatter indicators
    pp_ref,                    # (8, slab_w) f32 packed per-lane params
    o_ref,                     # (N*H, W*Co)
    *, N, H, W, Ce, Co, Cse, K, use_se, shortcut, inv_count,
):
    f32 = jnp.float32
    P = K // 2
    L = N * H
    Le, Lo, Lse = W * Ce, W * Co, W * Cse
    mdt = w1_ref.dtype          # MXU operand dtype (bf16 in the perf config)

    # packed per-lane parameters (conv biases b1/bd/b3 dropped: absorbed by BN)
    pp = pp_ref[...]
    g1, be1 = pp[0:1, :Le], pp[1:2, :Le]
    g2, be2 = pp[2:3, :Le], pp[3:4, :Le]
    bse1, bse2 = pp[4:5, :Lse], pp[5:6, :Le]
    g3, be3 = pp[6:7, :Lo], pp[7:8, :Lo]

    def bn_lane(y, gsum, gamma, beta, eps=1e-5):
        # Training-mode BatchNorm (biased variance), single pass: sum and
        # sum-of-squares in one sweep, reduced over the W lane-groups and
        # re-scattered per channel with ONE fused (2, lanes) f32 matmul.
        s1 = jnp.sum(y, axis=0, keepdims=True)
        s2 = jnp.sum(y * y, axis=0, keepdims=True)
        ch = jnp.dot(_stack_rows([s1, s2]), gsum, preferred_element_type=f32)
        mean = ch[0:1, :] * inv_count
        var = jnp.maximum(ch[1:2, :] * inv_count - mean * mean, 0.0)
        scale = gamma * jax.lax.rsqrt(var + eps)
        return y * scale + (beta - mean * scale)

    ge = ge_ref[...]
    go = go_ref[...]
    x = x_ref[...].astype(f32)

    # ---- 1x1 expansion conv (block-diagonal, lane-dense) + BN + h-swish ------
    y = jnp.dot(x.astype(mdt), w1_ref[...], preferred_element_type=f32)
    y = _hswish(bn_lane(y, ge, g1, be1))

    # ---- KxK depthwise conv, stride 1, SAME padding ---------------------------
    # Sublane roll (h-taps, image boundary mask) + lane roll (w-taps) +
    # per-tap lane-weight multiply.  No MXU pushes, no quadratic operands.
    wtap = wtap_ref[...].astype(f32)
    acc = None
    for di in range(K):
        if di == P:
            y_h = y
        else:
            y_h = pltpu.roll(y, (P - di) % L, axis=0) * hmask_ref[di]
        for dj in range(K):
            if dj == P:
                y_hw = y_h
            else:
                y_hw = pltpu.roll(y_h, ((P - dj) * Ce) % Le, axis=1)
            t = di * K + dj
            term = y_hw * wtap[t:t + 1, :]
            acc = term if acc is None else acc + term
    dw = _hswish(bn_lane(acc, ge, g2, be2))

    # ---- squeeze-excite -------------------------------------------------------
    # H-pool: per-image sublane sums (aligned static row slices).
    # W-pool: folded into the duplicated SE weights (wrapper).
    # Broadcast: per-image scale re-expanded over rows with iota + select.
    if use_se:
        pooled = _stack_rows(
            [jnp.sum(dw[n * H:(n + 1) * H, :], axis=0, keepdims=True)
             for n in range(N)]) * (1.0 / H)                       # (N, Le)
        h1 = jnp.maximum(
            jnp.dot(pooled.astype(mdt), wse1_ref[...],
                    preferred_element_type=f32) + bse1, 0.0)       # (N, Lse)
        sc = _hswish(
            jnp.dot(h1.astype(mdt), wse2_ref[...],
                    preferred_element_type=f32) + bse2)            # (N, Le)
        row_id = jax.lax.broadcasted_iota(jnp.int32, (L, Le), 0)
        scale_full = jnp.broadcast_to(sc[0:1, :], (L, Le))
        for n in range(1, N):
            scale_full = jnp.where(row_id >= n * H,
                                   jnp.broadcast_to(sc[n:n + 1, :], (L, Le)),
                                   scale_full)
        dw = dw * scale_full

    # ---- 1x1 linear projection (block-diagonal) + BN --------------------------
    z = jnp.dot(dw.astype(mdt), w3_ref[...], preferred_element_type=f32)
    z = bn_lane(z, go, g3, be3)

    if shortcut:
        z = z + x

    o_ref[...] = z.astype(o_ref.dtype)


# ------------------------------ wrapper ---------------------------------------
def _prep_operands(x_nhwc, params, K, mxu_dtype):
    """Fold NHWC activations / per-channel params into lane-dense operands."""
    f32 = jnp.float32
    N, H, W, Ci = x_nhwc.shape
    Ce = params["w1"].shape[1]
    Co = params["w3"].shape[1]
    Cse = params["wse1"].shape[1]
    P = K // 2
    Le, Lo, Lse = W * Ce, W * Co, W * Cse
    slab_w = max(Le, Lo, Lse)

    eyeW = jnp.eye(W, dtype=f32)

    # activations: (N, H, W, C) -> (N*H, W*C); lane = w*C + c
    x2d = jnp.asarray(x_nhwc, f32).reshape(N * H, W * Ci)

    # 1x1 convs as block-diagonal lane-dense matmuls (bf16 MXU operands)
    w1_big = jnp.kron(eyeW, jnp.asarray(params["w1"], f32)).astype(mxu_dtype)
    w3_big = jnp.kron(eyeW, jnp.asarray(params["w3"], f32)).astype(mxu_dtype)

    # depthwise taps: per-lane weights with the w-boundary (lane) mask folded in
    wd = jnp.asarray(params["wd"], f32)                               # (K*K, Ce)
    lane_c = jnp.arange(Le) % Ce
    lane_w = jnp.arange(Le) // Ce
    wtap_rows = []
    for di in range(K):
        for dj in range(K):
            dwj = dj - P
            valid = ((lane_w + dwj >= 0) & (lane_w + dwj <= W - 1)).astype(f32)
            wtap_rows.append(wd[di * K + dj][lane_c] * valid)
    wtap = jnp.stack(wtap_rows, axis=0)                               # (K*K, Le)

    # h-boundary 0/1 masks per h-tap (pre-broadcast to lane width so the kernel
    # only does elementwise multiplies).  Linear in tile size, not quadratic.
    h_of_row = jnp.arange(N * H) % H
    hmask_rows = []
    for di in range(K):
        dh = di - P
        m = ((h_of_row + dh >= 0) & (h_of_row + dh <= H - 1)).astype(f32)
        hmask_rows.append(jnp.broadcast_to(m[:, None], (N * H, Le)))
    hmask = jnp.stack(hmask_rows, axis=0)                             # (K, N*H, Le)

    # squeeze-excite: 1/W pooling folded into duplicated SE weights
    wse1_dup = jnp.tile(jnp.asarray(params["wse1"], f32) / W, (W, W)).astype(mxu_dtype)
    wse2_dup = jnp.tile(jnp.asarray(params["wse2"], f32) / W, (W, W)).astype(mxu_dtype)

    # BN channel-sum / scatter indicator matrices (kept f32 for the stat path)
    ge = jnp.tile(jnp.eye(Ce, dtype=f32), (W, W))                     # (Le, Le)
    go = jnp.tile(jnp.eye(Co, dtype=f32), (W, W))                     # (Lo, Lo)

    # packed per-lane parameter slab (conv biases b1/bd/b3 dropped: BN absorbs them)
    def row(v, c, width):
        r = jnp.tile(jnp.asarray(v, f32).reshape(1, c), (1, W))
        return jnp.pad(r, ((0, 0), (0, slab_w - width)))
    pp = jnp.concatenate([
        row(params["g1"], Ce, Le), row(params["be1"], Ce, Le),
        row(params["g2"], Ce, Le), row(params["be2"], Ce, Le),
        row(params["bse1"], Cse, Lse), row(params["bse2"], Ce, Le),
        row(params["g3"], Co, Lo), row(params["be3"], Co, Lo),
    ], axis=0)                                                        # (8, slab_w)

    return [x2d, w1_big, hmask, wtap, wse1_dup, wse2_dup, w3_big, ge, go, pp]


def inverted_residual_block(x_nhwc, params, *, K, use_se, shortcut,
                            mxu_dtype=jnp.bfloat16):
    N, H, W, Ci = x_nhwc.shape
    Ce = params["w1"].shape[1]
    Co = params["w3"].shape[1]
    Cse = params["wse1"].shape[1]
    if shortcut:
        assert Ci == Co, "residual shortcut requires i == o"

    args = _prep_operands(x_nhwc, params, K, mxu_dtype)
    kernel = functools.partial(
        inverted_residual_kernel, N=N, H=H, W=W, Ce=Ce, Co=Co, Cse=Cse,
        K=K, use_se=use_se, shortcut=shortcut,
        inv_count=1.0 / float(N * H * W))

    vmem = pl.BlockSpec(memory_space=pltpu.MemorySpace.VMEM)
    out2d = pl.pallas_call(
        kernel,
        out_shape=jax.ShapeDtypeStruct((N * H, W * Co), x_nhwc.dtype),
        in_specs=[vmem] * len(args),
        out_specs=vmem,
    )(*args)
    # layout: back to NHWC in the wrapper, not inside the kernel
    return out2d.reshape(N, H, W, Co)


# ------------------------- pure-JAX reference ---------------------------------
def reference(x, params, *, K, use_se, shortcut):
    N, H, W, Ci = x.shape
    Ce = params["w1"].shape[1]
    P = K // 2
    hp = jax.lax.Precision.HIGHEST

    def bn(y, g, b, eps=1e-5):
        mu = jnp.mean(y, axis=(0, 1, 2), keepdims=True)
        var = jnp.mean((y - mu) ** 2, axis=(0, 1, 2), keepdims=True)
        return (y - mu) * jax.lax.rsqrt(var + eps) * g.reshape(1, 1, 1, -1) \
            + b.reshape(1, 1, 1, -1)

    y = jnp.einsum("nhwc,cd->nhwd", x, params["w1"], precision=hp) \
        + params["b1"].reshape(1, 1, 1, -1)
    y = _hswish(bn(y, params["g1"], params["be1"]))

    yp = jnp.pad(y, ((0, 0), (P, P), (P, P), (0, 0)))
    wd = params["wd"].reshape(K, K, Ce)
    dw = jnp.zeros_like(y)
    for di in range(K):
        for dj in range(K):
            dw = dw + yp[:, di:di + H, dj:dj + W, :] * wd[di, dj]
    dw = dw + params["bd"].reshape(1, 1, 1, -1)
    dw = _hswish(bn(dw, params["g2"], params["be2"]))

    if use_se:
        pooled = jnp.mean(dw, axis=(1, 2))
        h = jnp.maximum(
            jnp.dot(pooled, params["wse1"], precision=hp) + params["bse1"], 0.0)
        scale = _hswish(jnp.dot(h, params["wse2"], precision=hp) + params["bse2"])
        dw = dw * scale[:, None, None, :]

    z = jnp.einsum("nhwc,cd->nhwd", dw, params["w3"], precision=hp) \
        + params["b3"].reshape(1, 1, 1, -1)
    z = bn(z, params["g3"], params["be3"])
    if shortcut:
        z = z + x
    return z


def init_params(key, i_ch, t, o_ch, K):
    Ce = int(i_ch * t)
    Cse = _make_divisible(Ce // 4)
    ks = jax.random.split(key, 18)

    def nrm(k, shape, scale=0.1):
        return scale * jax.random.normal(k, shape, jnp.float32)

    return dict(
        w1=nrm(ks[0], (i_ch, Ce)), b1=nrm(ks[1], (1, Ce)),
        g1=1.0 + nrm(ks[2], (1, Ce)), be1=nrm(ks[3], (1, Ce)),
        wd=nrm(ks[4], (K * K, Ce)), bd=nrm(ks[5], (1, Ce)),
        g2=1.0 + nrm(ks[6], (1, Ce)), be2=nrm(ks[7], (1, Ce)),
        wse1=nrm(ks[8], (Ce, Cse)), bse1=nrm(ks[9], (1, Cse)),
        wse2=nrm(ks[10], (Cse, Ce)), bse2=nrm(ks[11], (1, Ce)),
        w3=nrm(ks[12], (Ce, o_ch)), b3=nrm(ks[13], (1, o_ch)),
        g3=1.0 + nrm(ks[14], (1, o_ch)), be3=nrm(ks[15], (1, o_ch)),
    )


if __name__ == "__main__":
    # Module config: inverted_residual_block(i=4, t=2, o=4, k=3, s=1, re=False, se=True)
    i_ch, t, o_ch, K, s = 4, 2, 4, 3, 1
    use_se = True
    shortcut = (i_ch == o_ch) and (s == 1)

    key = jax.random.PRNGKey(0)
    k_x, k_p = jax.random.split(key)

    # PyTorch input layout is NCHW: (2, 4, 16, 16)
    x_nchw = jax.random.normal(k_x, (2, i_ch, 16, 16), jnp.float32)
    x_nhwc = jnp.transpose(x_nchw, (0, 2, 3, 1))  # NHWC for the kernel wrapper

    params = init_params(k_p, i_ch, t, o_ch, K)

    ref = jax.block_until_ready(
        reference(x_nhwc, params, K=K, use_se=use_se, shortcut=shortcut))

    # 1) f32 MXU operands: tight check of the structural changes (rolls, masks,
    #    fused BN stats, SE restructure, dropped biases).
    out_f32 = jax.block_until_ready(inverted_residual_block(
        x_nhwc, params, K=K, use_se=use_se, shortcut=shortcut,
        mxu_dtype=jnp.float32))
    assert out_f32.shape == (2, 16, 16, o_ch), out_f32.shape
    assert jnp.allclose(out_f32, ref, atol=5e-3, rtol=5e-3), (
        float(jnp.max(jnp.abs(out_f32 - ref))))

    # 2) bf16 MXU operands (perf config from the review): same kernel, operand
    #    rounding (~2^-9 relative, amplified by the three batch-norms) means a
    #    correspondingly looser tolerance against the f32 reference.
    out_bf16 = jax.block_until_ready(inverted_residual_block(
        x_nhwc, params, K=K, use_se=use_se, shortcut=shortcut,
        mxu_dtype=jnp.bfloat16))
    assert out_bf16.shape == (2, 16, 16, o_ch), out_bf16.shape
    assert jnp.allclose(out_bf16, ref, atol=3e-2, rtol=3e-2), (
        float(jnp.max(jnp.abs(out_bf16 - ref))))

    print("KERNEL_OK")
</pallas_src>

<mosaic_0001>
module attributes {stable_mosaic.version = 11 : i64} {
  func.func @inverted_residual_kernel(%arg0: memref<32x64xf32, #tpu.memory_space<vmem>>, %arg1: memref<64x128xf32, #tpu.memory_space<vmem>>, %arg2: memref<3x32x128xf32, #tpu.memory_space<vmem>>, %arg3: memref<9x128xf32, #tpu.memory_space<vmem>>, %arg4: memref<128x128xf32, #tpu.memory_space<vmem>>, %arg5: memref<128x128xf32, #tpu.memory_space<vmem>>, %arg6: memref<128x64xf32, #tpu.memory_space<vmem>>, %arg7: memref<128x128xf32, #tpu.memory_space<vmem>>, %arg8: memref<64x64xf32, #tpu.memory_space<vmem>>, %arg9: memref<8x128xf32, #tpu.memory_space<vmem>>, %arg10: memref<32x64xf32, #tpu.memory_space<vmem>>) attributes {dimension_semantics = [], scalar_prefetch = 0 : i64, scratch_operands = 0 : i64, tpu.core_type = #tpu.core_type<tc>} {
    %c0 = arith.constant 0 : index
    %c0_0 = arith.constant 0 : index
    %0 = vector.load %arg9[%c0, %c0_0] : memref<8x128xf32, #tpu.memory_space<vmem>>, vector<8x128xf32>
    %1 = vector.extract_strided_slice %0 {offsets = [0, 0], sizes = [1, 128], strides = [1, 1]} : vector<8x128xf32> to vector<1x128xf32>
    %2 = vector.extract_strided_slice %0 {offsets = [1, 0], sizes = [1, 128], strides = [1, 1]} : vector<8x128xf32> to vector<1x128xf32>
    %3 = vector.extract_strided_slice %0 {offsets = [2, 0], sizes = [1, 128], strides = [1, 1]} : vector<8x128xf32> to vector<1x128xf32>
    %4 = vector.extract_strided_slice %0 {offsets = [3, 0], sizes = [1, 128], strides = [1, 1]} : vector<8x128xf32> to vector<1x128xf32>
    %5 = vector.extract_strided_slice %0 {offsets = [4, 0], sizes = [1, 128], strides = [1, 1]} : vector<8x128xf32> to vector<1x128xf32>
    %6 = vector.extract_strided_slice %0 {offsets = [5, 0], sizes = [1, 128], strides = [1, 1]} : vector<8x128xf32> to vector<1x128xf32>
    %7 = vector.extract_strided_slice %0 {offsets = [6, 0], sizes = [1, 64], strides = [1, 1]} : vector<8x128xf32> to vector<1x64xf32>
    %8 = vector.extract_strided_slice %0 {offsets = [7, 0], sizes = [1, 64], strides = [1, 1]} : vector<8x128xf32> to vector<1x64xf32>
    %c0_1 = arith.constant 0 : index
    %c0_2 = arith.constant 0 : index
    %9 = vector.load %arg7[%c0_1, %c0_2] : memref<128x128xf32, #tpu.memory_space<vmem>>, vector<128x128xf32>
    %c0_3 = arith.constant 0 : index
    %c0_4 = arith.constant 0 : index
    %10 = vector.load %arg8[%c0_3, %c0_4] : memref<64x64xf32, #tpu.memory_space<vmem>>, vector<64x64xf32>
    %c0_5 = arith.constant 0 : index
    %c0_6 = arith.constant 0 : index
    %11 = vector.load %arg0[%c0_5, %c0_6] : memref<32x64xf32, #tpu.memory_space<vmem>>, vector<32x64xf32>
    %c0_7 = arith.constant 0 : index
    %c0_8 = arith.constant 0 : index
    %12 = vector.load %arg1[%c0_7, %c0_8] : memref<64x128xf32, #tpu.memory_space<vmem>>, vector<64x128xf32>
    %cst = arith.constant dense<0.000000e+00> : vector<32x128xf32>
    %13 = tpu.matmul %11, %12, %cst {dimension_numbers = #tpu.dot_dimension_numbers<[1], [0], [0], [1], [0, 0, 1, 1], [], []>} : vector<32x64xf32>, vector<64x128xf32>, vector<32x128xf32> -> vector<32x128xf32>
    %cst_9 = arith.constant dense<0.000000e+00> : vector<128xf32>
    %14 = vector.multi_reduction <add>, %13, %cst_9 [0] : vector<32x128xf32> to vector<128xf32>
    %15 = vector.shape_cast %14 : vector<128xf32> to vector<1x128xf32>
    %16 = arith.mulf %13, %13 : vector<32x128xf32>
    %cst_10 = arith.constant dense<0.000000e+00> : vector<128xf32>
    %17 = vector.multi_reduction <add>, %16, %cst_10 [0] : vector<32x128xf32> to vector<128xf32>
    %18 = vector.shape_cast %17 : vector<128xf32> to vector<1x128xf32>
    %19 = tpu.iota {dimensions = array<i32: 0>} : vector<2x128xi32>
    %20 = vector.shape_cast %15 : vector<1x128xf32> to vector<1x128xf32>
    %21 = vector.broadcast %20 : vector<1x128xf32> to vector<2x128xf32>
    %c1_i32 = arith.constant 1 : i32
    %22 = vector.broadcast %c1_i32 : i32 to vector<2x128xi32>
    %23 = arith.cmpi eq, %19, %22 : vector<2x128xi32>
    %24 = vector.shape_cast %18 : vector<1x128xf32> to vector<1x128xf32>
    %25 = vector.broadcast %24 : vector<1x128xf32> to vector<2x128xf32>
    %26 = arith.select %23, %25, %21 : vector<2x128xi1>, vector<2x128xf32>
    %cst_11 = arith.constant dense<0.000000e+00> : vector<2x128xf32>
    %27 = tpu.matmul %26, %9, %cst_11 {dimension_numbers = #tpu.dot_dimension_numbers<[1], [0], [0], [1], [0, 0, 1, 1], [], []>} : vector<2x128xf32>, vector<128x128xf32>, vector<2x128xf32> -> vector<2x128xf32>
    %28 = vector.extract_strided_slice %27 {offsets = [0, 0], sizes = [1, 128], strides = [1, 1]} : vector<2x128xf32> to vector<1x128xf32>
    %cst_12 = arith.constant 0.001953125 : f32
    %29 = vector.broadcast %cst_12 : f32 to vector<1x128xf32>
    %30 = arith.mulf %28, %29 : vector<1x128xf32>
    %31 = vector.extract_strided_slice %27 {offsets = [1, 0], sizes = [1, 128], strides = [1, 1]} : vector<2x128xf32> to vector<1x128xf32>
    %cst_13 = arith.constant 0.001953125 : f32
    %32 = vector.broadcast %cst_13 : f32 to vector<1x128xf32>
    %33 = arith.mulf %31, %32 : vector<1x128xf32>
    %34 = arith.mulf %30, %30 : vector<1x128xf32>
    %35 = arith.subf %33, %34 : vector<1x128xf32>
    %cst_14 = arith.constant 0.000000e+00 : f32
    %36 = vector.broadcast %cst_14 : f32 to vector<1x128xf32>
    %37 = arith.maximumf %35, %36 : vector<1x128xf32>
    %cst_15 = arith.constant 9.99999974E-6 : f32
    %38 = vector.broadcast %cst_15 : f32 to vector<1x128xf32>
    %39 = arith.addf %37, %38 : vector<1x128xf32>
    %40 = math.rsqrt %39 : vector<1x128xf32>
    %41 = arith.mulf %1, %40 : vector<1x128xf32>
    %42 = vector.broadcast %41 : vector<1x128xf32> to vector<32x128xf32>
    %43 = arith.mulf %13, %42 : vector<32x128xf32>
    %44 = arith.mulf %30, %41 : vector<1x128xf32>
    %45 = arith.subf %2, %44 : vector<1x128xf32>
    %46 = vector.broadcast %45 : vector<1x128xf32> to vector<32x128xf32>
    %47 = arith.addf %43, %46 : vector<32x128xf32>
    %cst_16 = arith.constant 3.000000e+00 : f32
    %48 = vector.broadcast %cst_16 : f32 to vector<32x128xf32>
    %49 = arith.addf %47, %48 : vector<32x128xf32>
    %cst_17 = arith.constant 0.000000e+00 : f32
    %cst_18 = arith.constant 6.000000e+00 : f32
    %50 = vector.broadcast %cst_17 : f32 to vector<32x128xf32>
    %51 = arith.maximumf %50, %49 : vector<32x128xf32>
    %52 = vector.broadcast %cst_18 : f32 to vector<32x128xf32>
    %53 = arith.minimumf %52, %51 : vector<32x128xf32>
    %cst_19 = arith.constant 0.166666672 : f32
    %54 = vector.broadcast %cst_19 : f32 to vector<32x128xf32>
    %55 = arith.mulf %53, %54 : vector<32x128xf32>
    %56 = arith.mulf %47, %55 : vector<32x128xf32>
    %c0_20 = arith.constant 0 : index
    %c0_21 = arith.constant 0 : index
    %57 = vector.load %arg3[%c0_20, %c0_21] : memref<9x128xf32, #tpu.memory_space<vmem>>, vector<9x128xf32>
    %c1_i32_22 = arith.constant 1 : i32
    %58 = tpu.dynamic_rotate %56 by %c1_i32_22 dim 0 : vector<32x128xf32>, i32 -> vector<32x128xf32>
    %c0_23 = arith.constant 0 : index
    %c0_24 = arith.constant 0 : index
    %c0_25 = arith.constant 0 : index
    %59 = vector.load %arg2[%c0_23, %c0_24, %c0_25] : memref<3x32x128xf32, #tpu.memory_space<vmem>>, vector<1x32x128xf32>
    %60 = vector.shape_cast %59 : vector<1x32x128xf32> to vector<32x128xf32>
    %61 = arith.mulf %58, %60 : vector<32x128xf32>
    %c8_i32 = arith.constant 8 : i32
    %62 = tpu.dynamic_rotate %61 by %c8_i32 dim 1 : vector<32x128xf32>, i32 -> vector<32x128xf32>
    %63 = vector.extract_strided_slice %57 {offsets = [0, 0], sizes = [1, 128], strides = [1, 1]} : vector<9x128xf32> to vector<1x128xf32>
    %64 = vector.broadcast %63 : vector<1x128xf32> to vector<32x128xf32>
    %65 = arith.mulf %62, %64 : vector<32x128xf32>
    %66 = vector.extract_strided_slice %57 {offsets = [1, 0], sizes = [1, 128], strides = [1, 1]} : vector<9x128xf32> to vector<1x128xf32>
    %67 = vector.broadcast %66 : vector<1x128xf32> to vector<32x128xf32>
    %68 = arith.mulf %61, %67 : vector<32x128xf32>
    %69 = arith.addf %65, %68 : vector<32x128xf32>
    %c120_i32 = arith.constant 120 : i32
    %70 = tpu.dynamic_rotate %61 by %c120_i32 dim 1 : vector<32x128xf32>, i32 -> vector<32x128xf32>
    %71 = vector.extract_strided_slice %57 {offsets = [2, 0], sizes = [1, 128], strides = [1, 1]} : vector<9x128xf32> to vector<1x128xf32>
    %72 = vector.broadcast %71 : vector<1x128xf32> to vector<32x128xf32>
    %73 = arith.mulf %70, %72 : vector<32x128xf32>
    %74 = arith.addf %69, %73 : vector<32x128xf32>
    %c8_i32_26 = arith.constant 8 : i32
    %75 = tpu.dynamic_rotate %56 by %c8_i32_26 dim 1 : vector<32x128xf32>, i32 -> vector<32x128xf32>
    %76 = vector.extract_strided_slice %57 {offsets = [3, 0], sizes = [1, 128], strides = [1, 1]} : vector<9x128xf32> to vector<1x128xf32>
    %77 = vector.broadcast %76 : vector<1x128xf32> to vector<32x128xf32>
    %78 = arith.mulf %75, %77 : vector<32x128xf32>
    %79 = arith.addf %74, %78 : vector<32x128xf32>
    %80 = vector.extract_strided_slice %57 {offsets = [4, 0], sizes = [1, 128], strides = [1, 1]} : vector<9x128xf32> to vector<1x128xf32>
    %81 = vector.broadcast %80 : vector<1x128xf32> to vector<32x128xf32>
    %82 = arith.mulf %56, %81 : vector<32x128xf32>
    %83 = arith.addf %79, %82 : vector<32x128xf32>
    %c120_i32_27 = arith.constant 120 : i32
    %84 = tpu.dynamic_rotate %56 by %c120_i32_27 dim 1 : vector<32x128xf32>, i32 -> vector<32x128xf32>
    %85 = vector.extract_strided_slice %57 {offsets = [5, 0], sizes = [1, 128], strides = [1, 1]} : vector<9x128xf32> to vector<1x128xf32>
    %86 = vector.broadcast %85 : vector<1x128xf32> to vector<32x128xf32>
    %87 = arith.mulf %84, %86 : vector<32x128xf32>
    %88 = arith.addf %83, %87 : vector<32x128xf32>
    %c31_i32 = arith.constant 31 : i32
    %89 = tpu.dynamic_rotate %56 by %c31_i32 dim 0 : vector<32x128xf32>, i32 -> vector<32x128xf32>
    %c2 = arith.constant 2 : index
    %c0_28 = arith.constant 0 : index
    %c0_29 = arith.constant 0 : index
    %90 = vector.load %arg2[%c2, %c0_28, %c0_29] : memref<3x32x128xf32, #tpu.memory_space<vmem>>, vector<1x32x128xf32>
    %91 = vector.shape_cast %90 : vector<1x32x128xf32> to vector<32x128xf32>
    %92 = arith.mulf %89, %91 : vector<32x128xf32>
    %c8_i32_30 = arith.constant 8 : i32
    %93 = tpu.dynamic_rotate %92 by %c8_i32_30 dim 1 : vector<32x128xf32>, i32 -> vector<32x128xf32>
    %94 = vector.extract_strided_slice %57 {offsets = [6, 0], sizes = [1, 128], strides = [1, 1]} : vector<9x128xf32> to vector<1x128xf32>
    %95 = vector.broadcast %94 : vector<1x128xf32> to vector<32x128xf32>
    %96 = arith.mulf %93, %95 : vector<32x128xf32>
    %97 = arith.addf %88, %96 : vector<32x128xf32>
    %98 = vector.extract_strided_slice %57 {offsets = [7, 0], sizes = [1, 128], strides = [1, 1]} : vector<9x128xf32> to vector<1x128xf32>
    %99 = vector.broadcast %98 : vector<1x128xf32> to vector<32x128xf32>
    %100 = arith.mulf %92, %99 : vector<32x128xf32>
    %101 = arith.addf %97, %100 : vector<32x128xf32>
    %c120_i32_31 = arith.constant 120 : i32
    %102 = tpu.dynamic_rotate %92 by %c120_i32_31 dim 1 : vector<32x128xf32>, i32 -> vector<32x128xf32>
    %103 = vector.extract_strided_slice %57 {offsets = [8, 0], sizes = [1, 128], strides = [1, 1]} : vector<9x128xf32> to vector<1x128xf32>
    %104 = vector.broadcast %103 : vector<1x128xf32> to vector<32x128xf32>
    %105 = arith.mulf %102, %104 : vector<32x128xf32>
    %106 = arith.addf %101, %105 : vector<32x128xf32>
    %cst_32 = arith.constant dense<0.000000e+00> : vector<128xf32>
    %107 = vector.multi_reduction <add>, %106, %cst_32 [0] : vector<32x128xf32> to vector<128xf32>
    %108 = vector.shape_cast %107 : vector<128xf32> to vector<1x128xf32>
    %109 = arith.mulf %106, %106 : vector<32x128xf32>
    %cst_33 = arith.constant dense<0.000000e+00> : vector<128xf32>
    %110 = vector.multi_reduction <add>, %109, %cst_33 [0] : vector<32x128xf32> to vector<128xf32>
    %111 = vector.shape_cast %110 : vector<128xf32> to vector<1x128xf32>
    %112 = tpu.iota {dimensions = array<i32: 0>} : vector<2x128xi32>
    %113 = vector.shape_cast %108 : vector<1x128xf32> to vector<1x128xf32>
    %114 = vector.broadcast %113 : vector<1x128xf32> to vector<2x128xf32>
    %c1_i32_34 = arith.constant 1 : i32
    %115 = vector.broadcast %c1_i32_34 : i32 to vector<2x128xi32>
    %116 = arith.cmpi eq, %112, %115 : vector<2x128xi32>
    %117 = vector.shape_cast %111 : vector<1x128xf32> to vector<1x128xf32>
    %118 = vector.broadcast %117 : vector<1x128xf32> to vector<2x128xf32>
    %119 = arith.select %116, %118, %114 : vector<2x128xi1>, vector<2x128xf32>
    %cst_35 = arith.constant dense<0.000000e+00> : vector<2x128xf32>
    %120 = tpu.matmul %119, %9, %cst_35 {dimension_numbers = #tpu.dot_dimension_numbers<[1], [0], [0], [1], [0, 0, 1, 1], [], []>} : vector<2x128xf32>, vector<128x128xf32>, vector<2x128xf32> -> vector<2x128xf32>
    %121 = vector.extract_strided_slice %120 {offsets = [0, 0], sizes = [1, 128], strides = [1, 1]} : vector<2x128xf32> to vector<1x128xf32>
    %cst_36 = arith.constant 0.001953125 : f32
    %122 = vector.broadcast %cst_36 : f32 to vector<1x128xf32>
    %123 = arith.mulf %121, %122 : vector<1x128xf32>
    %124 = vector.extract_strided_slice %120 {offsets = [1, 0], sizes = [1, 128], strides = [1, 1]} : vector<2x128xf32> to vector<1x128xf32>
    %cst_37 = arith.constant 0.001953125 : f32
    %125 = vector.broadcast %cst_37 : f32 to vector<1x128xf32>
    %126 = arith.mulf %124, %125 : vector<1x128xf32>
    %127 = arith.mulf %123, %123 : vector<1x128xf32>
    %128 = arith.subf %126, %127 : vector<1x128xf32>
    %cst_38 = arith.constant 0.000000e+00 : f32
    %129 = vector.broadcast %cst_38 : f32 to vector<1x128xf32>
    %130 = arith.maximumf %128, %129 : vector<1x128xf32>
    %cst_39 = arith.constant 9.99999974E-6 : f32
    %131 = vector.broadcast %cst_39 : f32 to vector<1x128xf32>
    %132 = arith.addf %130, %131 : vector<1x128xf32>
    %133 = math.rsqrt %132 : vector<1x128xf32>
    %134 = arith.mulf %3, %133 : vector<1x128xf32>
    %135 = vector.broadcast %134 : vector<1x128xf32> to vector<32x128xf32>
    %136 = arith.mulf %106, %135 : vector<32x128xf32>
    %137 = arith.mulf %123, %134 : vector<1x128xf32>
    %138 = arith.subf %4, %137 : vector<1x128xf32>
    %139 = vector.broadcast %138 : vector<1x128xf32> to vector<32x128xf32>
    %140 = arith.addf %136, %139 : vector<32x128xf32>
    %cst_40 = arith.constant 3.000000e+00 : f32
    %141 = vector.broadcast %cst_40 : f32 to vector<32x128xf32>
    %142 = arith.addf %140, %141 : vector<32x128xf32>
    %cst_41 = arith.constant 0.000000e+00 : f32
    %cst_42 = arith.constant 6.000000e+00 : f32
    %143 = vector.broadcast %cst_41 : f32 to vector<32x128xf32>
    %144 = arith.maximumf %143, %142 : vector<32x128xf32>
    %145 = vector.broadcast %cst_42 : f32 to vector<32x128xf32>
    %146 = arith.minimumf %145, %144 : vector<32x128xf32>
    %cst_43 = arith.constant 0.166666672 : f32
    %147 = vector.broadcast %cst_43 : f32 to vector<32x128xf32>
    %148 = arith.mulf %146, %147 : vector<32x128xf32>
    %149 = arith.mulf %140, %148 : vector<32x128xf32>
    %150 = vector.extract_strided_slice %149 {offsets = [0, 0], sizes = [16, 128], strides = [1, 1]} : vector<32x128xf32> to vector<16x128xf32>
    %cst_44 = arith.constant dense<0.000000e+00> : vector<128xf32>
    %151 = vector.multi_reduction <add>, %150, %cst_44 [0] : vector<16x128xf32> to vector<128xf32>
    %152 = vector.shape_cast %151 : vector<128xf32> to vector<1x128xf32>
    %153 = vector.extract_strided_slice %149 {offsets = [16, 0], sizes = [16, 128], strides = [1, 1]} : vector<32x128xf32> to vector<16x128xf32>
    %cst_45 = arith.constant dense<0.000000e+00> : vector<128xf32>
    %154 = vector.multi_reduction <add>, %153, %cst_45 [0] : vector<16x128xf32> to vector<128xf32>
    %155 = vector.shape_cast %154 : vector<128xf32> to vector<1x128xf32>
    %156 = tpu.iota {dimensions = array<i32: 0>} : vector<2x128xi32>
    %157 = vector.shape_cast %152 : vector<1x128xf32> to vector<1x128xf32>
    %158 = vector.broadcast %157 : vector<1x128xf32> to vector<2x128xf32>
    %c1_i32_46 = arith.constant 1 : i32
    %159 = vector.broadcast %c1_i32_46 : i32 to vector<2x128xi32>
    %160 = arith.cmpi eq, %156, %159 : vector<2x128xi32>
    %161 = vector.shape_cast %155 : vector<1x128xf32> to vector<1x128xf32>
    %162 = vector.broadcast %161 : vector<1x128xf32> to vector<2x128xf32>
    %163 = arith.select %160, %162, %158 : vector<2x128xi1>, vector<2x128xf32>
    %cst_47 = arith.constant 6.250000e-02 : f32
    %164 = vector.broadcast %cst_47 : f32 to vector<2x128xf32>
    %165 = arith.mulf %163, %164 : vector<2x128xf32>
    %c0_48 = arith.constant 0 : index
    %c0_49 = arith.constant 0 : index
    %166 = vector.load %arg4[%c0_48, %c0_49] : memref<128x128xf32, #tpu.memory_space<vmem>>, vector<128x128xf32>
    %cst_50 = arith.constant dense<0.000000e+00> : vector<2x128xf32>
    %167 = tpu.matmul %165, %166, %cst_50 {dimension_numbers = #tpu.dot_dimension_numbers<[1], [0], [0], [1], [0, 0, 1, 1], [], []>} : vector<2x128xf32>, vector<128x128xf32>, vector<2x128xf32> -> vector<2x128xf32>
    %168 = vector.broadcast %5 : vector<1x128xf32> to vector<2x128xf32>
    %169 = arith.addf %167, %168 : vector<2x128xf32>
    %cst_51 = arith.constant 0.000000e+00 : f32
    %170 = vector.broadcast %cst_51 : f32 to vector<2x128xf32>
    %171 = arith.maximumf %169, %170 : vector<2x128xf32>
    %c0_52 = arith.constant 0 : index
    %c0_53 = arith.constant 0 : index
    %172 = vector.load %arg5[%c0_52, %c0_53] : memref<128x128xf32, #tpu.memory_space<vmem>>, vector<128x128xf32>
    %cst_54 = arith.constant dense<0.000000e+00> : vector<2x128xf32>
    %173 = tpu.matmul %171, %172, %cst_54 {dimension_numbers = #tpu.dot_dimension_numbers<[1], [0], [0], [1], [0, 0, 1, 1], [], []>} : vector<2x128xf32>, vector<128x128xf32>, vector<2x128xf32> -> vector<2x128xf32>
    %174 = vector.broadcast %6 : vector<1x128xf32> to vector<2x128xf32>
    %175 = arith.addf %173, %174 : vector<2x128xf32>
    %cst_55 = arith.constant 3.000000e+00 : f32
    %176 = vector.broadcast %cst_55 : f32 to vector<2x128xf32>
    %177 = arith.addf %175, %176 : vector<2x128xf32>
    %cst_56 = arith.constant 0.000000e+00 : f32
    %cst_57 = arith.constant 6.000000e+00 : f32
    %178 = vector.broadcast %cst_56 : f32 to vector<2x128xf32>
    %179 = arith.maximumf %178, %177 : vector<2x128xf32>
    %180 = vector.broadcast %cst_57 : f32 to vector<2x128xf32>
    %181 = arith.minimumf %180, %179 : vector<2x128xf32>
    %cst_58 = arith.constant 0.166666672 : f32
    %182 = vector.broadcast %cst_58 : f32 to vector<2x128xf32>
    %183 = arith.mulf %181, %182 : vector<2x128xf32>
    %184 = arith.mulf %175, %183 : vector<2x128xf32>
    %185 = tpu.iota {dimensions = array<i32: 0>} : vector<32x128xi32>
    %186 = vector.extract_strided_slice %184 {offsets = [0, 0], sizes = [1, 128], strides = [1, 1]} : vector<2x128xf32> to vector<1x128xf32>
    %187 = vector.shape_cast %186 : vector<1x128xf32> to vector<1x128xf32>
    %188 = vector.broadcast %187 : vector<1x128xf32> to vector<32x128xf32>
    %c16_i32 = arith.constant 16 : i32
    %189 = vector.broadcast %c16_i32 : i32 to vector<32x128xi32>
    %190 = arith.cmpi sge, %185, %189 : vector<32x128xi32>
    %191 = vector.extract_strided_slice %184 {offsets = [1, 0], sizes = [1, 128], strides = [1, 1]} : vector<2x128xf32> to vector<1x128xf32>
    %192 = vector.shape_cast %191 : vector<1x128xf32> to vector<1x128xf32>
    %193 = vector.broadcast %192 : vector<1x128xf32> to vector<32x128xf32>
    %194 = arith.select %190, %193, %188 : vector<32x128xi1>, vector<32x128xf32>
    %195 = arith.mulf %149, %194 : vector<32x128xf32>
    %c0_59 = arith.constant 0 : index
    %c0_60 = arith.constant 0 : index
    %196 = vector.load %arg6[%c0_59, %c0_60] : memref<128x64xf32, #tpu.memory_space<vmem>>, vector<128x64xf32>
    %cst_61 = arith.constant dense<0.000000e+00> : vector<32x64xf32>
    %197 = tpu.matmul %195, %196, %cst_61 {dimension_numbers = #tpu.dot_dimension_numbers<[1], [0], [0], [1], [0, 0, 1, 1], [], []>} : vector<32x128xf32>, vector<128x64xf32>, vector<32x64xf32> -> vector<32x64xf32>
    %cst_62 = arith.constant dense<0.000000e+00> : vector<64xf32>
    %198 = vector.multi_reduction <add>, %197, %cst_62 [0] : vector<32x64xf32> to vector<64xf32>
    %199 = vector.shape_cast %198 : vector<64xf32> to vector<1x64xf32>
    %200 = arith.mulf %197, %197 : vector<32x64xf32>
    %cst_63 = arith.constant dense<0.000000e+00> : vector<64xf32>
    %201 = vector.multi_reduction <add>, %200, %cst_63 [0] : vector<32x64xf32> to vector<64xf32>
    %202 = vector.shape_cast %201 : vector<64xf32> to vector<1x64xf32>
    %203 = tpu.iota {dimensions = array<i32: 0>} : vector<2x64xi32>
    %204 = vector.shape_cast %199 : vector<1x64xf32> to vector<1x64xf32>
    %205 = vector.broadcast %204 : vector<1x64xf32> to vector<2x64xf32>
    %c1_i32_64 = arith.constant 1 : i32
    %206 = vector.broadcast %c1_i32_64 : i32 to vector<2x64xi32>
    %207 = arith.cmpi eq, %203, %206 : vector<2x64xi32>
    %208 = vector.shape_cast %202 : vector<1x64xf32> to vector<1x64xf32>
    %209 = vector.broadcast %208 : vector<1x64xf32> to vector<2x64xf32>
    %210 = arith.select %207, %209, %205 : vector<2x64xi1>, vector<2x64xf32>
    %cst_65 = arith.constant dense<0.000000e+00> : vector<2x64xf32>
    %211 = tpu.matmul %210, %10, %cst_65 {dimension_numbers = #tpu.dot_dimension_numbers<[1], [0], [0], [1], [0, 0, 1, 1], [], []>} : vector<2x64xf32>, vector<64x64xf32>, vector<2x64xf32> -> vector<2x64xf32>
    %212 = vector.extract_strided_slice %211 {offsets = [0, 0], sizes = [1, 64], strides = [1, 1]} : vector<2x64xf32> to vector<1x64xf32>
    %cst_66 = arith.constant 0.001953125 : f32
    %213 = vector.broadcast %cst_66 : f32 to vector<1x64xf32>
    %214 = arith.mulf %212, %213 : vector<1x64xf32>
    %215 = vector.extract_strided_slice %211 {offsets = [1, 0], sizes = [1, 64], strides = [1, 1]} : vector<2x64xf32> to vector<1x64xf32>
    %cst_67 = arith.constant 0.001953125 : f32
    %216 = vector.broadcast %cst_67 : f32 to vector<1x64xf32>
    %217 = arith.mulf %215, %216 : vector<1x64xf32>
    %218 = arith.mulf %214, %214 : vector<1x64xf32>
    %219 = arith.subf %217, %218 : vector<1x64xf32>
    %cst_68 = arith.constant 0.000000e+00 : f32
    %220 = vector.broadcast %cst_68 : f32 to vector<1x64xf32>
    %221 = arith.maximumf %219, %220 : vector<1x64xf32>
    %cst_69 = arith.constant 9.99999974E-6 : f32
    %222 = vector.broadcast %cst_69 : f32 to vector<1x64xf32>
    %223 = arith.addf %221, %222 : vector<1x64xf32>
    %224 = math.rsqrt %223 : vector<1x64xf32>
    %225 = arith.mulf %7, %224 : vector<1x64xf32>
    %226 = vector.broadcast %225 : vector<1x64xf32> to vector<32x64xf32>
    %227 = arith.mulf %197, %226 : vector<32x64xf32>
    %228 = arith.mulf %214, %225 : vector<1x64xf32>
    %229 = arith.subf %8, %228 : vector<1x64xf32>
    %230 = vector.broadcast %229 : vector<1x64xf32> to vector<32x64xf32>
    %231 = arith.addf %227, %230 : vector<32x64xf32>
    %232 = arith.addf %231, %11 : vector<32x64xf32>
    %c0_70 = arith.constant 0 : index
    %c0_71 = arith.constant 0 : index
    %233 = vector.load %arg10[%c0_70, %c0_71] : memref<32x64xf32, #tpu.memory_space<vmem>>, vector<32x64xf32>
    tpu.vector_store %arg10[%c0_70, %c0_71], %232 {strides = array<i32>} : memref<32x64xf32, #tpu.memory_space<vmem>>, vector<32x64xf32>,
    return
  }
}

</mosaic_0001>

<llo_original>
// kernel: tpu_custom_call.1
$region0: #{tpu_custom_call.1}
  #allocation0 [shape = 'u32[]', space=smem, size = 0x4, offset = 0x4, fixed_abs, tag = 'smem constant byte address 0x4 - core index']
  #allocation1 [shape = 'u32[144,128]{1,0:T(1,128)}', space=vmem, size = 0x12000, scoped, tag = 'internal scratch']
  %s0 = inlined_call_operand.hbm [shape: f32[32,64], index: 0, kind: input, shape index: {}]
  %s1 = inlined_call_operand.vmem [shape: f32[64,128], index: 1, kind: input, shape index: {}]
  %s2 = inlined_call_operand.hbm [shape: f32[3,32,128], index: 2, kind: input, shape index: {}]
  %s3 = inlined_call_operand.hbm [shape: f32[9,128], index: 3, kind: input, shape index: {}]
  %s4 = inlined_call_operand.vmem [shape: f32[128,128], index: 4, kind: input, shape index: {}]
  %s5 = inlined_call_operand.hbm [shape: f32[128,128], index: 5, kind: input, shape index: {}]
  %s6 = inlined_call_operand.vmem [shape: f32[128,64], index: 6, kind: input, shape index: {}]
  %s7 = inlined_call_operand.hbm [shape: f32[128,128], index: 7, kind: input, shape index: {}]
  %s8 = inlined_call_operand.hbm [shape: f32[64,64], index: 8, kind: input, shape index: {}]
  %s9 = inlined_call_operand.vmem [shape: f32[8,128], index: 9, kind: input, shape index: {}]
  %s10 = inlined_call_operand.hbm [shape: f32[32,64], index: 10, kind: output, shape index: {}]
  %s11 = sld [smem:[#allocation0]]
  $region74: #{tpu_custom_call.1} parent=0
    _
  %s13 = ssub.s32 1, %s11
  %s14 = scalar_select 0, %s13, %s11
  $region1: #{tpu_custom_call.1} parent=0
    #allocation2 [shape = 'u8[16384]{0}', space=vmem, size = 0x4000, scoped, tag = 'input window, operand 0, single buffered']
    #allocation3 [shape = 's32[1]{0}', space=sflag, size = 0x4, scoped, tag = 'scoped memory for tpu_custom_call.1']
    #allocation4 [shape = 's32[1]{0}', space=sflag, size = 0x4, scoped, tag = 'scoped memory for tpu_custom_call.1']
    #allocation5 [shape = 'u8[49152]{0}', space=vmem, size = 0xc000, scoped, tag = 'input window, operand 2, single buffered']
    #allocation6 [shape = 's32[1]{0}', space=sflag, size = 0x4, scoped, tag = 'scoped memory for tpu_custom_call.1']
    #allocation7 [shape = 'u8[8192]{0}', space=vmem, size = 0x2000, scoped, tag = 'input window, operand 3, single buffered']
    #allocation8 [shape = 'u8[65536]{0}', space=vmem, size = 0x10000, scoped, tag = 'input window, operand 5, single buffered']
    #allocation9 [shape = 's32[1]{0}', space=sflag, size = 0x4, scoped, tag = 'scoped memory for tpu_custom_call.1']
    #allocation10 [shape = 'u8[65536]{0}', space=vmem, size = 0x10000, scoped, tag = 'input window, operand 7, single buffered']
    #allocation11 [shape = 'u8[32768]{0}', space=vmem, size = 0x8000, scoped, tag = 'input window, operand 8, single buffered']
    #allocation12 [shape = 's32[1]{0}', space=sflag, size = 0x4, scoped, tag = 'scoped memory for tpu_custom_call.1']
    #allocation13 [shape = 'u8[16384]{0}', space=vmem, size = 0x4000, scoped, tag = 'output window, operand 0, single buffered']
    %15 = vsyncpa [#allocation3], 0
    %16 = vsyncpa [#allocation6], 0
    %17 = vsyncpa [#allocation9], 0
    %18 = vsyncpa [#allocation12], 0
    %19 = vsyncpa [#allocation4], 0
    // Predicated region
    $region2: #{tpu_custom_call.1} parent=1 // pred_check
      _
    $region3: #{tpu_custom_call.1} parent=1 // pred_check_branch
      %21 = sbr.rel (0) target = $region5
    $region4: #{tpu_custom_call.1} parent=1 // pred_region
      %s23 = ssub.s32 512, 512
      %24 = vsyncadd [#allocation3], %s23
      %s25 = sshll.u32 [#allocation2], 4
      %s26 = int_to_ptr.vmem [resolvable:$true] %s25
      %31 = dma.hbm_to_vmem [thread:$0]  %s0, 512, %s26, [#allocation3], 128, 128, 8
    $region5: #{tpu_custom_call.1} parent=1 // pred_fallthru
      _
    // Predicated region
    $region6: #{tpu_custom_call.1} parent=1 // pred_check
      _
    $region7: #{tpu_custom_call.1} parent=1 // pred_check_branch
      %33 = sbr.rel (0) target = $region9
    $region8: #{tpu_custom_call.1} parent=1 // pred_region
      _
    $region9: #{tpu_custom_call.1} parent=1 // pred_fallthru
      _
    // Predicated region
    $region10: #{tpu_custom_call.1} parent=1 // pred_check
      _
    $region11: #{tpu_custom_call.1} parent=1 // pred_check_branch
      %35 = sbr.rel (0) target = $region13
    $region12: #{tpu_custom_call.1} parent=1 // pred_region
      %s37 = ssub.s32 1536, 1536
      %38 = vsyncadd [#allocation6], %s37
      %s39 = sshll.u32 [#allocation5], 4
      %s40 = int_to_ptr.vmem [resolvable:$true] %s39
      %45 = dma.hbm_to_vmem [thread:$0]  %s2, 1536, %s40, [#allocation6], 128, 128, 8
    $region13: #{tpu_custom_call.1} parent=1 // pred_fallthru
      _
    // Predicated region
    $region14: #{tpu_custom_call.1} parent=1 // pred_check
      _
    $region15: #{tpu_custom_call.1} parent=1 // pred_check_branch
      %47 = sbr.rel (0) target = $region17
    $region16: #{tpu_custom_call.1} parent=1 // pred_region
      %s49 = ssub.s32 256, 256
      %50 = vsyncadd [#allocation6], %s49
      %s51 = sshll.u32 [#allocation7], 4
      %s52 = int_to_ptr.vmem [resolvable:$true] %s51
      %57 = dma.hbm_to_vmem [thread:$0]  %s3, 256, %s52, [#allocation6], 128, 128, 8
    $region17: #{tpu_custom_call.1} parent=1 // pred_fallthru
      _
    // Predicated region
    $region18: #{tpu_custom_call.1} parent=1 // pred_check
      _
    $region19: #{tpu_custom_call.1} parent=1 // pred_check_branch
      %59 = sbr.rel (0) target = $region21
    $region20: #{tpu_custom_call.1} parent=1 // pred_region
      _
    $region21: #{tpu_custom_call.1} parent=1 // pred_fallthru
      _
    // Predicated region
    $region22: #{tpu_custom_call.1} parent=1 // pred_check
      _
    $region23: #{tpu_custom_call.1} parent=1 // pred_check_branch
      %61 = sbr.rel (0) target = $region25
    $region24: #{tpu_custom_call.1} parent=1 // pred_region
      %s63 = ssub.s32 2048, 2048
      %64 = vsyncadd [#allocation9], %s63
      %s65 = sshll.u32 [#allocation8], 4
      %s66 = int_to_ptr.vmem [resolvable:$true] %s65
      %71 = dma.hbm_to_vmem [thread:$0]  %s5, 2048, %s66, [#allocation9], 128, 128, 8
    $region25: #{tpu_custom_call.1} parent=1 // pred_fallthru
      _
    // Predicated region
    $region26: #{tpu_custom_call.1} parent=1 // pred_check
      _
    $region27: #{tpu_custom_call.1} parent=1 // pred_check_branch
      %73 = sbr.rel (0) target = $region29
    $region28: #{tpu_custom_call.1} parent=1 // pred_region
      _
    $region29: #{tpu_custom_call.1} parent=1 // pred_fallthru
      _
    // Predicated region
    $region30: #{tpu_custom_call.1} parent=1 // pred_check
      _
    $region31: #{tpu_custom_call.1} parent=1 // pred_check_branch
      %75 = sbr.rel (0) target = $region33
    $region32: #{tpu_custom_call.1} parent=1 // pred_region
      %s77 = ssub.s32 2048, 2048
      %78 = vsyncadd [#allocation9], %s77
      %s79 = sshll.u32 [#allocation10], 4
      %s80 = int_to_ptr.vmem [resolvable:$true] %s79
      %85 = dma.hbm_to_vmem [thread:$0]  %s7, 2048, %s80, [#allocation9], 128, 128, 8
    $region33: #{tpu_custom_call.1} parent=1 // pred_fallthru
      _
    // Predicated region
    $region34: #{tpu_custom_call.1} parent=1 // pred_check
      _
    $region35: #{tpu_custom_call.1} parent=1 // pred_check_branch
      %87 = sbr.rel (0) target = $region37
    $region36: #{tpu_custom_call.1} parent=1 // pred_region
      %s89 = ssub.s32 1024, 1024
      %90 = vsyncadd [#allocation12], %s89
      %s91 = sshll.u32 [#allocation11], 4
      %s92 = int_to_ptr.vmem [resolvable:$true] %s91
      %97 = dma.hbm_to_vmem [thread:$0]  %s8, 1024, %s92, [#allocation12], 128, 128, 8
    $region37: #{tpu_custom_call.1} parent=1 // pred_fallthru
      _
    // Predicated region
    $region38: #{tpu_custom_call.1} parent=1 // pred_check
      _
    $region39: #{tpu_custom_call.1} parent=1 // pred_check_branch
      %99 = sbr.rel (0) target = $region41
    $region40: #{tpu_custom_call.1} parent=1 // pred_region
      _
    $region41: #{tpu_custom_call.1} parent=1 // pred_fallthru
      _
    // Predicated region
    $region42: #{tpu_custom_call.1} parent=1 // pred_check
      _
    $region43: #{tpu_custom_call.1} parent=1 // pred_check_branch
      %101 = sbr.rel (0) target = $region45
    $region44: #{tpu_custom_call.1} parent=1 // pred_region
      %102 = dma.done [#allocation3], 512
    $region45: #{tpu_custom_call.1} parent=1 // pred_fallthru
      _
    // Predicated region
    $region46: #{tpu_custom_call.1} parent=1 // pred_check
      _
    $region47: #{tpu_custom_call.1} parent=1 // pred_check_branch
      %104 = sbr.rel (0) target = $region49
    $region48: #{tpu_custom_call.1} parent=1 // pred_region
      %105 = dma.done [#allocation6], 1536
    $region49: #{tpu_custom_call.1} parent=1 // pred_fallthru
      _
    // Predicated region
    $region50: #{tpu_custom_call.1} parent=1 // pred_check
      _
    $region51: #{tpu_custom_call.1} parent=1 // pred_check_branch
      %107 = sbr.rel (0) target = $region53
    $region52: #{tpu_custom_call.1} parent=1 // pred_region
      %108 = dma.done [#allocation6], 256
    $region53: #{tpu_custom_call.1} parent=1 // pred_fallthru
      _
    // Predicated region
    $region54: #{tpu_custom_call.1} parent=1 // pred_check
      _
    $region55: #{tpu_custom_call.1} parent=1 // pred_check_branch
      %110 = sbr.rel (0) target = $region57
    $region56: #{tpu_custom_call.1} parent=1 // pred_region
      %111 = dma.done [#allocation9], 2048
    $region57: #{tpu_custom_call.1} parent=1 // pred_fallthru
      _
    // Predicated region
    $region58: #{tpu_custom_call.1} parent=1 // pred_check
      _
    $region59: #{tpu_custom_call.1} parent=1 // pred_check_branch
      %113 = sbr.rel (0) target = $region61
    $region60: #{tpu_custom_call.1} parent=1 // pred_region
      %114 = dma.done [#allocation9], 2048
    $region61: #{tpu_custom_call.1} parent=1 // pred_fallthru
      _
    // Predicated region
    $region62: #{tpu_custom_call.1} parent=1 // pred_check
      _
    $region63: #{tpu_custom_call.1} parent=1 // pred_check_branch
      %116 = sbr.rel (0) target = $region65
    $region64: #{tpu_custom_call.1} parent=1 // pred_region
      %117 = dma.done [#allocation12], 1024
    $region65: #{tpu_custom_call.1} parent=1 // pred_fallthru
      _
    %v118 = vld [vmem:[%s9] sm:$0xff]
    %v119 = vld [vmem:[#allocation10] sm:$0xff]
    %v120 = vld [vmem:[#allocation10 + $0x8] sm:$0xff]
    %v121 = vld [vmem:[#allocation10 + $0x10] sm:$0xff]
    %v122 = vld [vmem:[#allocation10 + $0x18] sm:$0xff]
    %v123 = vld [vmem:[#allocation10 + $0x20] sm:$0xff]
    %v124 = vld [vmem:[#allocation10 + $0x28] sm:$0xff]
    %v125 = vld [vmem:[#allocation10 + $0x30] sm:$0xff]
    %v126 = vld [vmem:[#allocation10 + $0x38] sm:$0xff]
    %v127 = vld [vmem:[#allocation10 + $0x40] sm:$0xff]
    %v128 = vld [vmem:[#allocation10 + $0x48] sm:$0xff]
    %v129 = vld [vmem:[#allocation10 + $0x50] sm:$0xff]
    %v130 = vld [vmem:[#allocation10 + $0x58] sm:$0xff]
    %v131 = vld [vmem:[#allocation10 + $0x60] sm:$0xff]
    %v132 = vld [vmem:[#allocation10 + $0x68] sm:$0xff]
    %v133 = vld [vmem:[#allocation10 + $0x70] sm:$0xff]
    %v134 = vld [vmem:[#allocation10 + $0x78] sm:$0xff]
    %v135 = vld [vmem:[#allocation11] sm:$0xff]
    %v136 = vld [vmem:[#allocation11 + $0x8] sm:$0xff]
    %v137 = vld [vmem:[#allocation11 + $0x10] sm:$0xff]
    %v138 = vld [vmem:[#allocation11 + $0x18] sm:$0xff]
    %v139 = vld [vmem:[#allocation11 + $0x20] sm:$0xff]
    %v140 = vld [vmem:[#allocation11 + $0x28] sm:$0xff]
    %v141 = vld [vmem:[#allocation11 + $0x30] sm:$0xff]
    %v142 = vld [vmem:[#allocation11 + $0x38] sm:$0xff]
    %v143 = vld [vmem:[#allocation2] sm:$0xff]
    %v144 = vld [vmem:[#allocation2 + $0x8] sm:$0xff]
    %v145 = vld [vmem:[#allocation2 + $0x10] sm:$0xff]
    %v146 = vld [vmem:[#allocation2 + $0x18] sm:$0xff]
    %v147 = vld [vmem:[%s1] sm:$0xff]
    %v148 = vld [vmem:[%s1 + $0x8] sm:$0xff]
    %v149 = vld [vmem:[%s1 + $0x10] sm:$0xff]
    %v150 = vld [vmem:[%s1 + $0x18] sm:$0xff]
    %v151 = vld [vmem:[%s1 + $0x20] sm:$0xff]
    %v152 = vld [vmem:[%s1 + $0x28] sm:$0xff]
    %v153 = vld [vmem:[%s1 + $0x30] sm:$0xff]
    %v154 = vld [vmem:[%s1 + $0x38] sm:$0xff]
    %vm155 = vcmask 523264
    %v157 = vsel %vm155, %v143, 0
    %v160 = vsel %vm155, %v144, 0
    %v163 = vsel %vm155, %v145, 0
    %v166 = vsel %vm155, %v146, 0
    %168 = vmatprep.subr.mxu0 0.0
    %169 = vmatpush1.msra.mxu0 %v147
    %170 = vmatprep.subr.mxu0 0.0
    %171 = vmatpush1.msra.mxu0 %v148
    %172 = vmatprep.subr.mxu0 0.0
    %173 = vmatpush1.msra.mxu0 %v149
    %174 = vmatprep.subr.mxu0 0.0
    %175 = vmatpush1.msra.mxu0 %v150
    %176 = vmatprep.subr.mxu0 0.0
    %177 = vmatpush1.msra.mxu0 %v151
    %178 = vmatprep.subr.mxu0 0.0
    %179 = vmatpush1.msra.mxu0 %v152
    %180 = vmatprep.subr.mxu0 0.0
    %181 = vmatpush1.msra.mxu0 %v153
    %182 = vmatprep.subr.mxu0 0.0
    %183 = vmatpush1.msra.mxu0 %v154
    %184 = vmatprep.subr.mxu0 0.0
    %185 = vmatpush1.msra.mxu0 0.0
    %186 = vmatprep.subr.mxu0 0.0
    %187 = vmatpush1.msra.mxu0 0.0
    %188 = vmatprep.subr.mxu0 0.0
    %189 = vmatpush1.msra.mxu0 0.0
    %190 = vmatprep.subr.mxu0 0.0
    %191 = vmatpush1.msra.mxu0 0.0
    %192 = vmatprep.subr.mxu0 0.0
    %193 = vmatpush1.msra.mxu0 0.0
    %194 = vmatprep.subr.mxu0 0.0
    %195 = vmatpush1.msra.mxu0 0.0
    %196 = vmatprep.subr.mxu0 0.0
    %197 = vmatpush1.msra.mxu0 0.0
    %198 = vmatprep.subr.mxu0 0.0
    %199 = vmatpush1.msra.mxu0 0.0
    %200 = vmatprep.subr.mxu0 0.0
    %201 = vmatpush1.msra.mxu0 0.0
    %202 = vmatprep.subr.mxu0 0.0
    %203 = vmatpush1.msra.mxu0 0.0
    %204 = vmatprep.subr.mxu0 0.0
    %205 = vmatpush1.msra.mxu0 0.0
    %206 = vmatprep.subr.mxu0 0.0
    %207 = vmatpush1.msra.mxu0 0.0
    %208 = vmatprep.subr.mxu0 0.0
    %209 = vmatpush1.msra.mxu0 0.0
    %210 = vmatprep.subr.mxu0 0.0
    %211 = vmatpush1.msra.mxu0 0.0
    %212 = vmatprep.subr.mxu0 0.0
    %213 = vmatpush1.msra.mxu0 0.0
    %214 = vmatprep.subr.mxu0 0.0
    %215 = vmatpush1.msra.mxu0 0.0
    %216 = vmatprep.subr.mxu0 0.0
    %217 = vmatpush1.msra.mxu0 0.0
    %218 = vmatprep.subr.mxu0 0.0
    %219 = vmatpush1.msra.mxu0 0.0
    %220 = vmatprep.subr.mxu0 0.0
    %221 = vmatpush1.msra.mxu0 0.0
    %222 = vmatprep.subr.mxu0 0.0
    %223 = vmatpush1.msra.mxu0 0.0
    %224 = vmatprep.subr.mxu0 0.0
    %225 = vmatpush1.msra.mxu0 0.0
    %226 = vmatprep.subr.mxu0 0.0
    %227 = vmatpush1.msra.mxu0 0.0
    %228 = vmatprep.subr.mxu0 0.0
    %229 = vmatpush1.msra.mxu0 0.0
    %230 = vmatprep.subr.mxu0 0.0
    %231 = vmatpush1.msra.mxu0 0.0
    %232 = vmatprep.mubr.f32.mxu0 0.0
    %233 = vmatmul.mubr.f32.gmra.mrb[0].mxu0 %v157
    %v234 = vpop.f32.mrb[0].mxu0
    %v235 = vadd.f32 0.0, %v234
    %v236 = vpop.f32.mrb[0].mxu0
    %237 = vmatprep.mubr.f32.mxu0 0.0
    %238 = vmatmul.mubr.f32.gmra.mrb[0].mxu0 %v160
    %v239 = vpop.f32.mrb[0].mxu0
    %v240 = vadd.f32 0.0, %v239
    %v241 = vpop.f32.mrb[0].mxu0
    %242 = vmatprep.mubr.f32.mxu0 0.0
    %243 = vmatmul.mubr.f32.gmra.mrb[0].mxu0 %v163
    %v244 = vpop.f32.mrb[0].mxu0
    %v245 = vadd.f32 0.0, %v244
    %v246 = vpop.f32.mrb[0].mxu0
    %247 = vmatprep.mubr.f32.mxu0 0.0
    %248 = vmatmul.mubr.f32.gmra.mrb[0].mxu0 %v166
    %v249 = vpop.f32.mrb[0].mxu0
    %v250 = vadd.f32 0.0, %v249
    %v251 = vpop.f32.mrb[0].mxu0
    %252 = vdwg.mxu0
    %v253 = vadd.f32 %v235, %v240
    %v254 = vadd.f32 %v253, %v245
    %v255 = vadd.f32 %v254, %v250
    %v256 = vrot.slane %v255, 4
    %v257 = vadd.f32 %v255, %v256
    %v258 = vrot.slane %v257, 2
    %v259 = vadd.f32 %v257, %v258
    %v260 = vrot.slane %v259, 1
    %v261 = vadd.f32 %v259, %v260
    %v262 = vmul.f32 %v235, %v235
    %v263 = vmul.f32 %v240, %v240
    %v264 = vmul.f32 %v245, %v245
    %v265 = vmul.f32 %v250, %v250
    %v266 = vadd.f32 %v262, %v263
    %v267 = vadd.f32 %v266, %v264
    %v268 = vadd.f32 %v267, %v265
    %v269 = vrot.slane %v268, 4
    %v270 = vadd.f32 %v268, %v269
    %v271 = vrot.slane %v270, 2
    %v272 = vadd.f32 %v270, %v271
    %v273 = vrot.slane %v272, 1
    %v274 = vadd.f32 %v272, %v273
    %v275 = vlaneseq
    %v276 = vshrl.u32 %v275, 7
    %vm277 = vcmp.eq.s32.totalorder %v276, 1
    %v278 = vsel %vm277, %v274, %v261
    %279 = vmatprep.subr.mxu0 0.0
    %280 = vmatpush1.msra.mxu0 %v119
    %281 = vmatprep.subr.mxu0 0.0
    %282 = vmatpush1.msra.mxu0 %v120
    %283 = vmatprep.subr.mxu0 0.0
    %284 = vmatpush1.msra.mxu0 %v121
    %285 = vmatprep.subr.mxu0 0.0
    %286 = vmatpush1.msra.mxu0 %v122
    %287 = vmatprep.subr.mxu0 0.0
    %288 = vmatpush1.msra.mxu0 %v123
    %289 = vmatprep.subr.mxu0 0.0
    %290 = vmatpush1.msra.mxu0 %v124
    %291 = vmatprep.subr.mxu0 0.0
    %292 = vmatpush1.msra.mxu0 %v125
    %293 = vmatprep.subr.mxu0 0.0
    %294 = vmatpush1.msra.mxu0 %v126
    %295 = vmatprep.subr.mxu0 0.0
    %296 = vmatpush1.msra.mxu0 %v127
    %297 = vmatprep.subr.mxu0 0.0
    %298 = vmatpush1.msra.mxu0 %v128
    %299 = vmatprep.subr.mxu0 0.0
    %300 = vmatpush1.msra.mxu0 %v129
    %301 = vmatprep.subr.mxu0 0.0
    %302 = vmatpush1.msra.mxu0 %v130
    %303 = vmatprep.subr.mxu0 0.0
    %304 = vmatpush1.msra.mxu0 %v131
    %305 = vmatprep.subr.mxu0 0.0
    %306 = vmatpush1.msra.mxu0 %v132
    %307 = vmatprep.subr.mxu0 0.0
    %308 = vmatpush1.msra.mxu0 %v133
    %309 = vmatprep.subr.mxu0 0.0
    %310 = vmatpush1.msra.mxu0 %v134
    %311 = vmatprep.subr.mxu0 0.0
    %312 = vmatpush1.msra.mxu0 0.0
    %313 = vmatprep.subr.mxu0 0.0
    %314 = vmatpush1.msra.mxu0 0.0
    %315 = vmatprep.subr.mxu0 0.0
    %316 = vmatpush1.msra.mxu0 0.0
    %317 = vmatprep.subr.mxu0 0.0
    %318 = vmatpush1.msra.mxu0 0.0
    %319 = vmatprep.subr.mxu0 0.0
    %320 = vmatpush1.msra.mxu0 0.0
    %321 = vmatprep.subr.mxu0 0.0
    %322 = vmatpush1.msra.mxu0 0.0
    %323 = vmatprep.subr.mxu0 0.0
    %324 = vmatpush1.msra.mxu0 0.0
    %325 = vmatprep.subr.mxu0 0.0
    %326 = vmatpush1.msra.mxu0 0.0
    %327 = vmatprep.subr.mxu0 0.0
    %328 = vmatpush1.msra.mxu0 0.0
    %329 = vmatprep.subr.mxu0 0.0
    %330 = vmatpush1.msra.mxu0 0.0
    %331 = vmatprep.subr.mxu0 0.0
    %332 = vmatpush1.msra.mxu0 0.0
    %333 = vmatprep.subr.mxu0 0.0
    %334 = vmatpush1.msra.mxu0 0.0
    %335 = vmatprep.subr.mxu0 0.0
    %336 = vmatpush1.msra.mxu0 0.0
    %337 = vmatprep.subr.mxu0 0.0
    %338 = vmatpush1.msra.mxu0 0.0
    %339 = vmatprep.subr.mxu0 0.0
    %340 = vmatpush1.msra.mxu0 0.0
    %341 = vmatprep.subr.mxu0 0.0
    %342 = vmatpush1.msra.mxu0 0.0
    %343 = vmatprep.mubr.f32.mxu0 0.0
    %344 = vmatmul.mubr.f32.gmra.mrb[0].mxu0 %v278
    %v345 = vpop.f32.mrb[0].mxu0
    %v346 = vadd.f32 0.0, %v345
    %v347 = vpop.f32.mrb[0].mxu0
    %348 = vdwg.mxu0
    %v349 = vmul.f32 %v346, 0.001953125
    %v350 = vmul.f32 %v349, %v349
    %v352 = vrot.slane %v350, 7
    %v354 = vsub.f32 %v349, %v352
    %v355 = vmax.f32 %v354, 0.0
    %v356 = vadd.f32 %v355, 1e-05
    %v357 = vrsqrt.pop %v356
    %v359 = vrot.slane %v357, 1
    %v361 = vmul.f32 %v118, %v359
    %v362 = vlaneseq
    %v363 = vshrl.u32 %v362, 7
    %v364 = vsub.s32 0, %v363
    %v365 = vrot.slane %v361, %v364
    %v366 = vmul.f32 %v235, %v365
    %v367 = vmul.f32 %v240, %v365
    %v368 = vmul.f32 %v245, %v365
    %v369 = vmul.f32 %v250, %v365
    %v370 = vmul.f32 %v349, %v361
    %v372 = vrot.slane %v370, 7
    %v374 = vsub.f32 %v118, %v372
    %v375 = vlaneseq
    %v376 = vshrl.u32 %v375, 7
    %v377 = vsub.s32 1, %v376
    %v378 = vrot.slane %v374, %v377
    %v379 = vadd.f32 %v366, %v378
    %v380 = vadd.f32 %v367, %v378
    %v381 = vadd.f32 %v368, %v378
    %v382 = vadd.f32 %v369, %v378
    %v383 = vadd.f32 %v379, 3.0
    %v384 = vadd.f32 %v380, 3.0
    %v385 = vadd.f32 %v381, 3.0
    %v386 = vadd.f32 %v382, 3.0
    %v387 = vmax.f32 %v383, 0.0
    %v388 = vmax.f32 %v384, 0.0
    %v389 = vmax.f32 %v385, 0.0
    %v390 = vmax.f32 %v386, 0.0
    %v391 = vmin.f32 %v387, 6.0
    %v392 = vmin.f32 %v388, 6.0
    %v393 = vmin.f32 %v389, 6.0
    %v394 = vmin.f32 %v390, 6.0
    %v395 = vmul.f32 %v391, 0.16666667
    %v396 = vmul.f32 %v392, 0.16666667
    %v397 = vmul.f32 %v393, 0.16666667
    %v398 = vmul.f32 %v394, 0.16666667
    %v399 = vmul.f32 %v379, %v395
    %v400 = vmul.f32 %v380, %v396
    %v401 = vmul.f32 %v381, %v397
    %v402 = vmul.f32 %v382, %v398
    %v403 = vld [vmem:[#allocation7] sm:$0xff]
    %v404 = vld [vmem:[#allocation7 + $0x8] sm:$0x1]
    %v405 = vrot.slane %v399, 7
    %v406 = vrot.slane %v400, 7
    %v407 = vrot.slane %v401, 7
    %v408 = vrot.slane %v402, 7
    %vm409 = vcmp.lt.s32.totalorder %v276, 1
    %v410 = vsel %vm409, %v407, %v408
    %v411 = vsel %vm409, %v406, %v407
    %v412 = vsel %vm409, %v405, %v406
    %v413 = vsel %vm409, %v408, %v405
    %v414 = vld [vmem:[#allocation5] sm:$0xff]
    %v415 = vld [vmem:[#allocation5 + $0x8] sm:$0xff]
    %v416 = vld [vmem:[#allocation5 + $0x10] sm:$0xff]
    %v417 = vld [vmem:[#allocation5 + $0x18] sm:$0xff]
    %v418 = vmul.f32 %v413, %v414
    %v419 = vmul.f32 %v412, %v415
    %v420 = vmul.f32 %v411, %v416
    %v421 = vmul.f32 %v410, %v417
    %422 = vrot.lane.b32.xlu0 %v418, 8
    %v423 = vpop.permute.xlu0 %422
    %424 = vrot.lane.b32.xlu0 %v419, 8
    %v425 = vpop.permute.xlu0 %424
    %426 = vrot.lane.b32.xlu0 %v420, 8
    %v427 = vpop.permute.xlu0 %426
    %428 = vrot.lane.b32.xlu0 %v421, 8
    %v429 = vpop.permute.xlu0 %428
    %v430 = vlaneseq
    %v431 = vshrl.u32 %v430, 7
    %v432 = vsub.s32 0, %v431
    %v433 = vrot.slane %v403, %v432
    %v434 = vmul.f32 %v423, %v433
    %v435 = vmul.f32 %v425, %v433
    %v436 = vmul.f32 %v427, %v433
    %v437 = vmul.f32 %v429, %v433
    %v438 = vlaneseq
    %v439 = vshrl.u32 %v438, 7
    %v440 = vsub.s32 1, %v439
    %v441 = vrot.slane %v403, %v440
    %v442 = vmul.f32 %v418, %v441
    %v443 = vmul.f32 %v419, %v441
    %v444 = vmul.f32 %v420, %v441
    %v445 = vmul.f32 %v421, %v441
    %v446 = vadd.f32 %v434, %v442
    %v447 = vadd.f32 %v435, %v443
    %v448 = vadd.f32 %v436, %v444
    %v449 = vadd.f32 %v437, %v445
    %450 = vrot.lane.b32.xlu0 %v418, 120
    %v451 = vpop.permute.xlu0 %450
    %452 = vrot.lane.b32.xlu0 %v419, 120
    %v453 = vpop.permute.xlu0 %452
    %454 = vrot.lane.b32.xlu0 %v420, 120
    %v455 = vpop.permute.xlu0 %454
    %456 = vrot.lane.b32.xlu0 %v421, 120
    %v457 = vpop.permute.xlu0 %456
    %v458 = vlaneseq
    %v459 = vshrl.u32 %v458, 7
    %v460 = vsub.s32 2, %v459
    %v461 = vrot.slane %v403, %v460
    %v462 = vmul.f32 %v451, %v461
    %v463 = vmul.f32 %v453, %v461
    %v464 = vmul.f32 %v455, %v461
    %v465 = vmul.f32 %v457, %v461
    %v466 = vadd.f32 %v446, %v462
    %v467 = vadd.f32 %v447, %v463
    %v468 = vadd.f32 %v448, %v464
    %v469 = vadd.f32 %v449, %v465
    %470 = vrot.lane.b32.xlu0 %v399, 8
    %v471 = vpop.permute.xlu0 %470
    %472 = vrot.lane.b32.xlu0 %v400, 8
    %v473 = vpop.permute.xlu0 %472
    %474 = vrot.lane.b32.xlu0 %v401, 8
    %v475 = vpop.permute.xlu0 %474
    %476 = vrot.lane.b32.xlu0 %v402, 8
    %v477 = vpop.permute.xlu0 %476
    %v478 = vlaneseq
    %v479 = vshrl.u32 %v478, 7
    %v480 = vsub.s32 3, %v479
    %v481 = vrot.slane %v403, %v480
    %v482 = vmul.f32 %v471, %v481
    %v483 = vmul.f32 %v473, %v481
    %v484 = vmul.f32 %v475, %v481
    %v485 = vmul.f32 %v477, %v481
    %v486 = vadd.f32 %v466, %v482
    %v487 = vadd.f32 %v467, %v483
    %v488 = vadd.f32 %v468, %v484
    %v489 = vadd.f32 %v469, %v485
    %v490 = vlaneseq
    %v491 = vshrl.u32 %v490, 7
    %v492 = vsub.s32 4, %v491
    %v493 = vrot.slane %v403, %v492
    %v494 = vmul.f32 %v399, %v493
    %v495 = vmul.f32 %v400, %v493
    %v496 = vmul.f32 %v401, %v493
    %v497 = vmul.f32 %v402, %v493
    %v498 = vadd.f32 %v486, %v494
    %v499 = vadd.f32 %v487, %v495
    %v500 = vadd.f32 %v488, %v496
    %v501 = vadd.f32 %v489, %v497
    %502 = vrot.lane.b32.xlu0 %v399, 120
    %v503 = vpop.permute.xlu0 %502
    %504 = vrot.lane.b32.xlu0 %v400, 120
    %v505 = vpop.permute.xlu0 %504
    %506 = vrot.lane.b32.xlu0 %v401, 120
    %v507 = vpop.permute.xlu0 %506
    %508 = vrot.lane.b32.xlu0 %v402, 120
    %v509 = vpop.permute.xlu0 %508
    %v510 = vlaneseq
    %v511 = vshrl.u32 %v510, 7
    %v512 = vsub.s32 5, %v511
    %v513 = vrot.slane %v403, %v512
    %v514 = vmul.f32 %v503, %v513
    %v515 = vmul.f32 %v505, %v513
    %v516 = vmul.f32 %v507, %v513
    %v517 = vmul.f32 %v509, %v513
    %v518 = vadd.f32 %v498, %v514
    %v519 = vadd.f32 %v499, %v515
    %v520 = vadd.f32 %v500, %v516
    %v521 = vadd.f32 %v501, %v517
    %v522 = vrot.slane %v399, 1
    %v523 = vrot.slane %v400, 1
    %v524 = vrot.slane %v401, 1
    %v525 = vrot.slane %v402, 1
    %vm526 = vcmp.lt.s32.totalorder %v276, 7
    %v527 = vsel %vm526, %v524, %v525
    %v528 = vsel %vm526, %v523, %v524
    %v529 = vsel %vm526, %v522, %v523
    %v530 = vsel %vm526, %v525, %v522
    %s531 = scalar_lea.vmem [#allocation5], 64
    %v532 = vld [vmem:[%s531] sm:$0xff]
    %v533 = vld [vmem:[%s531 + $0x8] sm:$0xff]
    %v534 = vld [vmem:[%s531 + $0x10] sm:$0xff]
    %v535 = vld [vmem:[%s531 + $0x18] sm:$0xff]
    %v536 = vmul.f32 %v529, %v532
    %v537 = vmul.f32 %v528, %v533
    %v538 = vmul.f32 %v527, %v534
    %v539 = vmul.f32 %v530, %v535
    %540 = vrot.lane.b32.xlu0 %v536, 8
    %v541 = vpop.permute.xlu0 %540
    %542 = vrot.lane.b32.xlu0 %v537, 8
    %v543 = vpop.permute.xlu0 %542
    %544 = vrot.lane.b32.xlu0 %v538, 8
    %v545 = vpop.permute.xlu0 %544
    %546 = vrot.lane.b32.xlu0 %v539, 8
    %v547 = vpop.permute.xlu0 %546
    %v548 = vlaneseq
    %v549 = vshrl.u32 %v548, 7
    %v550 = vsub.s32 6, %v549
    %v551 = vrot.slane %v403, %v550
    %v552 = vmul.f32 %v541, %v551
    %v553 = vmul.f32 %v543, %v551
    %v554 = vmul.f32 %v545, %v551
    %v555 = vmul.f32 %v547, %v551
    %v556 = vadd.f32 %v518, %v552
    %v557 = vadd.f32 %v519, %v553
    %v558 = vadd.f32 %v520, %v554
    %v559 = vadd.f32 %v521, %v555
    %v560 = vlaneseq
    %v561 = vshrl.u32 %v560, 7
    %v562 = vsub.s32 7, %v561
    %v563 = vrot.slane %v403, %v562
    %v564 = vmul.f32 %v536, %v563
    %v565 = vmul.f32 %v537, %v563
    %v566 = vmul.f32 %v538, %v563
    %v567 = vmul.f32 %v539, %v563
    %v568 = vadd.f32 %v556, %v564
    %v569 = vadd.f32 %v557, %v565
    %v570 = vadd.f32 %v558, %v566
    %v571 = vadd.f32 %v559, %v567
    %572 = vrot.lane.b32.xlu0 %v536, 120
    %v573 = vpop.permute.xlu0 %572
    %574 = vrot.lane.b32.xlu0 %v537, 120
    %v575 = vpop.permute.xlu0 %574
    %576 = vrot.lane.b32.xlu0 %v538, 120
    %v577 = vpop.permute.xlu0 %576
    %578 = vrot.lane.b32.xlu0 %v539, 120
    %v579 = vpop.permute.xlu0 %578
    %v580 = vlaneseq
    %v581 = vshrl.u32 %v580, 7
    %v582 = vsub.s32 0, %v581
    %v583 = vrot.slane %v404, %v582
    %v584 = vmul.f32 %v573, %v583
    %v585 = vmul.f32 %v575, %v583
    %v586 = vmul.f32 %v577, %v583
    %v587 = vmul.f32 %v579, %v583
    %v588 = vadd.f32 %v568, %v584
    %v589 = vadd.f32 %v569, %v585
    %v590 = vadd.f32 %v570, %v586
    %v591 = vadd.f32 %v571, %v587
    %v592 = vadd.f32 %v588, %v589
    %v593 = vadd.f32 %v592, %v590
    %v594 = vadd.f32 %v593, %v591
    %v595 = vrot.slane %v594, 4
    %v596 = vadd.f32 %v594, %v595
    %v597 = vrot.slane %v596, 2
    %v598 = vadd.f32 %v596, %v597
    %v599 = vrot.slane %v598, 1
    %v600 = vadd.f32 %v598, %v599
    %v601 = vmul.f32 %v588, %v588
    %v602 = vmul.f32 %v589, %v589
    %v603 = vmul.f32 %v590, %v590
    %v604 = vmul.f32 %v591, %v591
    %v605 = vadd.f32 %v601, %v602
    %v606 = vadd.f32 %v605, %v603
    %v607 = vadd.f32 %v606, %v604
    %v608 = vrot.slane %v607, 4
    %v609 = vadd.f32 %v607, %v608
    %v610 = vrot.slane %v609, 2
    %v611 = vadd.f32 %v609, %v610
    %v612 = vrot.slane %v611, 1
    %v613 = vadd.f32 %v611, %v612
    %v614 = vsel %vm277, %v613, %v600
    %615 = vmatprep.subr.mxu0 0.0
    %616 = vmatpush1.msra.mxu0 %v119
    %617 = vmatprep.subr.mxu0 0.0
    %618 = vmatpush1.msra.mxu0 %v120
    %619 = vmatprep.subr.mxu0 0.0
    %620 = vmatpush1.msra.mxu0 %v121
    %621 = vmatprep.subr.mxu0 0.0
    %622 = vmatpush1.msra.mxu0 %v122
    %623 = vmatprep.subr.mxu0 0.0
    %624 = vmatpush1.msra.mxu0 %v123
    %625 = vmatprep.subr.mxu0 0.0
    %626 = vmatpush1.msra.mxu0 %v124
    %627 = vmatprep.subr.mxu0 0.0
    %628 = vmatpush1.msra.mxu0 %v125
    %629 = vmatprep.subr.mxu0 0.0
    %630 = vmatpush1.msra.mxu0 %v126
    %631 = vmatprep.subr.mxu0 0.0
    %632 = vmatpush1.msra.mxu0 %v127
    %633 = vmatprep.subr.mxu0 0.0
    %634 = vmatpush1.msra.mxu0 %v128
    %635 = vmatprep.subr.mxu0 0.0
    %636 = vmatpush1.msra.mxu0 %v129
    %637 = vmatprep.subr.mxu0 0.0
    %638 = vmatpush1.msra.mxu0 %v130
    %639 = vmatprep.subr.mxu0 0.0
    %640 = vmatpush1.msra.mxu0 %v131
    %641 = vmatprep.subr.mxu0 0.0
    %642 = vmatpush1.msra.mxu0 %v132
    %643 = vmatprep.subr.mxu0 0.0
    %644 = vmatpush1.msra.mxu0 %v133
    %645 = vmatprep.subr.mxu0 0.0
    %646 = vmatpush1.msra.mxu0 %v134
    %647 = vmatprep.subr.mxu0 0.0
    %648 = vmatpush1.msra.mxu0 0.0
    %649 = vmatprep.subr.mxu0 0.0
    %650 = vmatpush1.msra.mxu0 0.0
    %651 = vmatprep.subr.mxu0 0.0
    %652 = vmatpush1.msra.mxu0 0.0
    %653 = vmatprep.subr.mxu0 0.0
    %654 = vmatpush1.msra.mxu0 0.0
    %655 = vmatprep.subr.mxu0 0.0
    %656 = vmatpush1.msra.mxu0 0.0
    %657 = vmatprep.subr.mxu0 0.0
    %658 = vmatpush1.msra.mxu0 0.0
    %659 = vmatprep.subr.mxu0 0.0
    %660 = vmatpush1.msra.mxu0 0.0
    %661 = vmatprep.subr.mxu0 0.0
    %662 = vmatpush1.msra.mxu0 0.0
    %663 = vmatprep.subr.mxu0 0.0
    %664 = vmatpush1.msra.mxu0 0.0
    %665 = vmatprep.subr.mxu0 0.0
    %666 = vmatpush1.msra.mxu0 0.0
    %667 = vmatprep.subr.mxu0 0.0
    %668 = vmatpush1.msra.mxu0 0.0
    %669 = vmatprep.subr.mxu0 0.0
    %670 = vmatpush1.msra.mxu0 0.0
    %671 = vmatprep.subr.mxu0 0.0
    %672 = vmatpush1.msra.mxu0 0.0
    %673 = vmatprep.subr.mxu0 0.0
    %674 = vmatpush1.msra.mxu0 0.0
    %675 = vmatprep.subr.mxu0 0.0
    %676 = vmatpush1.msra.mxu0 0.0
    %677 = vmatprep.subr.mxu0 0.0
    %678 = vmatpush1.msra.mxu0 0.0
    %679 = vmatprep.mubr.f32.mxu0 0.0
    %680 = vmatmul.mubr.f32.gmra.mrb[0].mxu0 %v614
    %v681 = vpop.f32.mrb[0].mxu0
    %v682 = vadd.f32 0.0, %v681
    %v683 = vpop.f32.mrb[0].mxu0
    %684 = vdwg.mxu0
    %v685 = vmul.f32 %v682, 0.001953125
    %v686 = vmul.f32 %v685, %v685
    %v688 = vrot.slane %v686, 7
    %v690 = vsub.f32 %v685, %v688
    %v691 = vmax.f32 %v690, 0.0
    %v692 = vadd.f32 %v691, 1e-05
    %v693 = vrsqrt.pop %v692
    %v695 = vrot.slane %v693, 7
    %v697 = vmul.f32 %v118, %v695
    %v698 = vlaneseq
    %v699 = vshrl.u32 %v698, 7
    %v700 = vsub.s32 2, %v699
    %v701 = vrot.slane %v697, %v700
    %v702 = vmul.f32 %v588, %v701
    %v703 = vmul.f32 %v589, %v701
    %v704 = vmul.f32 %v590, %v701
    %v705 = vmul.f32 %v591, %v701
    %v707 = vrot.slane %v697, 2
    %v709 = vmul.f32 %v685, %v707
    %v711 = vrot.slane %v709, 5
    %v713 = vsub.f32 %v118, %v711
    %v714 = vlaneseq
    %v715 = vshrl.u32 %v714, 7
    %v716 = vsub.s32 3, %v715
    %v717 = vrot.slane %v713, %v716
    %v718 = vadd.f32 %v702, %v717
    %v719 = vadd.f32 %v703, %v717
    %v720 = vadd.f32 %v704, %v717
    %v721 = vadd.f32 %v705, %v717
    %v722 = vadd.f32 %v718, 3.0
    %v723 = vadd.f32 %v719, 3.0
    %v724 = vadd.f32 %v720, 3.0
    %v725 = vadd.f32 %v721, 3.0
    %v726 = vmax.f32 %v722, 0.0
    %v727 = vmax.f32 %v723, 0.0
    %v728 = vmax.f32 %v724, 0.0
    %v729 = vmax.f32 %v725, 0.0
    %v730 = vmin.f32 %v726, 6.0
    %v731 = vmin.f32 %v727, 6.0
    %v732 = vmin.f32 %v728, 6.0
    %v733 = vmin.f32 %v729, 6.0
    %v734 = vmul.f32 %v730, 0.16666667
    %v735 = vmul.f32 %v731, 0.16666667
    %v736 = vmul.f32 %v732, 0.16666667
    %v737 = vmul.f32 %v733, 0.16666667
    %v738 = vmul.f32 %v718, %v734
    %v739 = vmul.f32 %v719, %v735
    %v740 = vmul.f32 %v720, %v736
    %v741 = vmul.f32 %v721, %v737
    %v742 = vadd.f32 %v738, %v739
    %v743 = vrot.slane %v742, 4
    %v744 = vadd.f32 %v742, %v743
    %v745 = vrot.slane %v744, 2
    %v746 = vadd.f32 %v744, %v745
    %v747 = vrot.slane %v746, 1
    %v748 = vadd.f32 %v746, %v747
    %v749 = vadd.f32 %v740, %v741
    %v750 = vrot.slane %v749, 4
    %v751 = vadd.f32 %v749, %v750
    %v752 = vrot.slane %v751, 2
    %v753 = vadd.f32 %v751, %v752
    %v754 = vrot.slane %v753, 1
    %v755 = vadd.f32 %v753, %v754
    %v756 = vsel %vm277, %v755, %v748
    %v757 = vmul.f32 %v756, 0.0625
    %v758 = vld [vmem:[%s4] sm:$0xff]
    %v759 = vld [vmem:[%s4 + $0x8] sm:$0xff]
    %v760 = vld [vmem:[%s4 + $0x10] sm:$0xff]
    %v761 = vld [vmem:[%s4 + $0x18] sm:$0xff]
    %v762 = vld [vmem:[%s4 + $0x20] sm:$0xff]
    %v763 = vld [vmem:[%s4 + $0x28] sm:$0xff]
    %v764 = vld [vmem:[%s4 + $0x30] sm:$0xff]
    %v765 = vld [vmem:[%s4 + $0x38] sm:$0xff]
    %v766 = vld [vmem:[%s4 + $0x40] sm:$0xff]
    %v767 = vld [vmem:[%s4 + $0x48] sm:$0xff]
    %v768 = vld [vmem:[%s4 + $0x50] sm:$0xff]
    %v769 = vld [vmem:[%s4 + $0x58] sm:$0xff]
    %v770 = vld [vmem:[%s4 + $0x60] sm:$0xff]
    %v771 = vld [vmem:[%s4 + $0x68] sm:$0xff]
    %v772 = vld [vmem:[%s4 + $0x70] sm:$0xff]
    %v773 = vld [vmem:[%s4 + $0x78] sm:$0xff]
    %v774 = vlaneseq
    %v775 = vshrl.u32 %v774, 7
    %v776 = vsub.s32 4, %v775
    %v777 = vrot.slane %v118, %v776
    %778 = vmatprep.subr.mxu0 0.0
    %779 = vmatpush1.msra.mxu0 %v758
    %780 = vmatprep.subr.mxu0 0.0
    %781 = vmatpush1.msra.mxu0 %v759
    %782 = vmatprep.subr.mxu0 0.0
    %783 = vmatpush1.msra.mxu0 %v760
    %784 = vmatprep.subr.mxu0 0.0
    %785 = vmatpush1.msra.mxu0 %v761
    %786 = vmatprep.subr.mxu0 0.0
    %787 = vmatpush1.msra.mxu0 %v762
    %788 = vmatprep.subr.mxu0 0.0
    %789 = vmatpush1.msra.mxu0 %v763
    %790 = vmatprep.subr.mxu0 0.0
    %791 = vmatpush1.msra.mxu0 %v764
    %792 = vmatprep.subr.mxu0 0.0
    %793 = vmatpush1.msra.mxu0 %v765
    %794 = vmatprep.subr.mxu0 0.0
    %795 = vmatpush1.msra.mxu0 %v766
    %796 = vmatprep.subr.mxu0 0.0
    %797 = vmatpush1.msra.mxu0 %v767
    %798 = vmatprep.subr.mxu0 0.0
    %799 = vmatpush1.msra.mxu0 %v768
    %800 = vmatprep.subr.mxu0 0.0
    %801 = vmatpush1.msra.mxu0 %v769
    %802 = vmatprep.subr.mxu0 0.0
    %803 = vmatpush1.msra.mxu0 %v770
    %804 = vmatprep.subr.mxu0 0.0
    %805 = vmatpush1.msra.mxu0 %v771
    %806 = vmatprep.subr.mxu0 0.0
    %807 = vmatpush1.msra.mxu0 %v772
    %808 = vmatprep.subr.mxu0 0.0
    %809 = vmatpush1.msra.mxu0 %v773
    %810 = vmatprep.subr.mxu0 0.0
    %811 = vmatpush1.msra.mxu0 0.0
    %812 = vmatprep.subr.mxu0 0.0
    %813 = vmatpush1.msra.mxu0 0.0
    %814 = vmatprep.subr.mxu0 0.0
    %815 = vmatpush1.msra.mxu0 0.0
    %816 = vmatprep.subr.mxu0 0.0
    %817 = vmatpush1.msra.mxu0 0.0
    %818 = vmatprep.subr.mxu0 0.0
    %819 = vmatpush1.msra.mxu0 0.0
    %820 = vmatprep.subr.mxu0 0.0
    %821 = vmatpush1.msra.mxu0 0.0
    %822 = vmatprep.subr.mxu0 0.0
    %823 = vmatpush1.msra.mxu0 0.0
    %824 = vmatprep.subr.mxu0 0.0
    %825 = vmatpush1.msra.mxu0 0.0
    %826 = vmatprep.subr.mxu0 0.0
    %827 = vmatpush1.msra.mxu0 0.0
    %828 = vmatprep.subr.mxu0 0.0
    %829 = vmatpush1.msra.mxu0 0.0
    %830 = vmatprep.subr.mxu0 0.0
    %831 = vmatpush1.msra.mxu0 0.0
    %832 = vmatprep.subr.mxu0 0.0
    %833 = vmatpush1.msra.mxu0 0.0
    %834 = vmatprep.subr.mxu0 0.0
    %835 = vmatpush1.msra.mxu0 0.0
    %836 = vmatprep.subr.mxu0 0.0
    %837 = vmatpush1.msra.mxu0 0.0
    %838 = vmatprep.subr.mxu0 0.0
    %839 = vmatpush1.msra.mxu0 0.0
    %840 = vmatprep.subr.mxu0 0.0
    %841 = vmatpush1.msra.mxu0 0.0
    %842 = vmatprep.mubr.f32.mxu0 0.0
    %843 = vmatmul.mubr.f32.gmra.mrb[0].mxu0 %v757
    %v844 = vpop.f32.mrb[0].mxu0
    %v845 = vadd.f32 %v777, %v844
    %v846 = vpop.f32.mrb[0].mxu0
    %847 = vdwg.mxu0
    %v848 = vmax.f32 %v845, 0.0
    %v849 = vld [vmem:[#allocation8] sm:$0xff]
    %v850 = vld [vmem:[#allocation8 + $0x8] sm:$0xff]
    %v851 = vld [vmem:[#allocation8 + $0x10] sm:$0xff]
    %v852 = vld [vmem:[#allocation8 + $0x18] sm:$0xff]
    %v853 = vld [vmem:[#allocation8 + $0x20] sm:$0xff]
    %v854 = vld [vmem:[#allocation8 + $0x28] sm:$0xff]
    %v855 = vld [vmem:[#allocation8 + $0x30] sm:$0xff]
    %v856 = vld [vmem:[#allocation8 + $0x38] sm:$0xff]
    %v857 = vld [vmem:[#allocation8 + $0x40] sm:$0xff]
    %v858 = vld [vmem:[#allocation8 + $0x48] sm:$0xff]
    %v859 = vld [vmem:[#allocation8 + $0x50] sm:$0xff]
    %v860 = vld [vmem:[#allocation8 + $0x58] sm:$0xff]
    %v861 = vld [vmem:[#allocation8 + $0x60] sm:$0xff]
    %v862 = vld [vmem:[#allocation8 + $0x68] sm:$0xff]
    %v863 = vld [vmem:[#allocation8 + $0x70] sm:$0xff]
    %v864 = vld [vmem:[#allocation8 + $0x78] sm:$0xff]
    %v865 = vlaneseq
    %v866 = vshrl.u32 %v865, 7
    %v867 = vsub.s32 5, %v866
    %v868 = vrot.slane %v118, %v867
    %869 = vmatprep.subr.mxu0 0.0
    %870 = vmatpush1.msra.mxu0 %v849
    %871 = vmatprep.subr.mxu0 0.0
    %872 = vmatpush1.msra.mxu0 %v850
    %873 = vmatprep.subr.mxu0 0.0
    %874 = vmatpush1.msra.mxu0 %v851
    %875 = vmatprep.subr.mxu0 0.0
    %876 = vmatpush1.msra.mxu0 %v852
    %877 = vmatprep.subr.mxu0 0.0
    %878 = vmatpush1.msra.mxu0 %v853
    %879 = vmatprep.subr.mxu0 0.0
    %880 = vmatpush1.msra.mxu0 %v854
    %881 = vmatprep.subr.mxu0 0.0
    %882 = vmatpush1.msra.mxu0 %v855
    %883 = vmatprep.subr.mxu0 0.0
    %884 = vmatpush1.msra.mxu0 %v856
    %885 = vmatprep.subr.mxu0 0.0
    %886 = vmatpush1.msra.mxu0 %v857
    %887 = vmatprep.subr.mxu0 0.0
    %888 = vmatpush1.msra.mxu0 %v858
    %889 = vmatprep.subr.mxu0 0.0
    %890 = vmatpush1.msra.mxu0 %v859
    %891 = vmatprep.subr.mxu0 0.0
    %892 = vmatpush1.msra.mxu0 %v860
    %893 = vmatprep.subr.mxu0 0.0
    %894 = vmatpush1.msra.mxu0 %v861
    %895 = vmatprep.subr.mxu0 0.0
    %896 = vmatpush1.msra.mxu0 %v862
    %897 = vmatprep.subr.mxu0 0.0
    %898 = vmatpush1.msra.mxu0 %v863
    %899 = vmatprep.subr.mxu0 0.0
    %900 = vmatpush1.msra.mxu0 %v864
    %901 = vmatprep.subr.mxu0 0.0
    %902 = vmatpush1.msra.mxu0 0.0
    %903 = vmatprep.subr.mxu0 0.0
    %904 = vmatpush1.msra.mxu0 0.0
    %905 = vmatprep.subr.mxu0 0.0
    %906 = vmatpush1.msra.mxu0 0.0
    %907 = vmatprep.subr.mxu0 0.0
    %908 = vmatpush1.msra.mxu0 0.0
    %909 = vmatprep.subr.mxu0 0.0
    %910 = vmatpush1.msra.mxu0 0.0
    %911 = vmatprep.subr.mxu0 0.0
    %912 = vmatpush1.msra.mxu0 0.0
    %913 = vmatprep.subr.mxu0 0.0
    %914 = vmatpush1.msra.mxu0 0.0
    %915 = vmatprep.subr.mxu0 0.0
    %916 = vmatpush1.msra.mxu0 0.0
    %917 = vmatprep.subr.mxu0 0.0
    %918 = vmatpush1.msra.mxu0 0.0
    %919 = vmatprep.subr.mxu0 0.0
    %920 = vmatpush1.msra.mxu0 0.0
    %921 = vmatprep.subr.mxu0 0.0
    %922 = vmatpush1.msra.mxu0 0.0
    %923 = vmatprep.subr.mxu0 0.0
    %924 = vmatpush1.msra.mxu0 0.0
    %925 = vmatprep.subr.mxu0 0.0
    %926 = vmatpush1.msra.mxu0 0.0
    %927 = vmatprep.subr.mxu0 0.0
    %928 = vmatpush1.msra.mxu0 0.0
    %929 = vmatprep.subr.mxu0 0.0
    %930 = vmatpush1.msra.mxu0 0.0
    %931 = vmatprep.subr.mxu0 0.0
    %932 = vmatpush1.msra.mxu0 0.0
    %933 = vmatprep.mubr.f32.mxu0 0.0
    %934 = vmatmul.mubr.f32.gmra.mrb[0].mxu0 %v848
    %v935 = vpop.f32.mrb[0].mxu0
    %v936 = vadd.f32 %v868, %v935
    %v937 = vpop.f32.mrb[0].mxu0
    %938 = vdwg.mxu0
    %v939 = vadd.f32 %v936, 3.0
    %v940 = vmax.f32 %v939, 0.0
    %v941 = vmin.f32 %v940, 6.0
    %v942 = vmul.f32 %v941, 0.16666667
    %v943 = vmul.f32 %v936, %v942
    %v944 = vadd.s32 %v276, 8
    %v945 = vadd.s32 %v276, 16
    %v946 = vadd.s32 %v276, 24
    %v947 = vlaneseq
    %v948 = vshrl.u32 %v947, 7
    %v949 = vsub.s32 0, %v948
    %v950 = vrot.slane %v943, %v949
    %vm951 = vcmp.ge.s32.totalorder %v276, 16
    %vm952 = vcmp.ge.s32.totalorder %v944, 16
    %vm953 = vcmp.ge.s32.totalorder %v945, 16
    %vm954 = vcmp.ge.s32.totalorder %v946, 16
    %v955 = vlaneseq
    %v956 = vshrl.u32 %v955, 7
    %v957 = vsub.s32 1, %v956
    %v958 = vrot.slane %v943, %v957
    %v959 = vsel %vm951, %v958, %v950
    %v960 = vsel %vm952, %v958, %v950
    %v961 = vsel %vm953, %v958, %v950
    %v962 = vsel %vm954, %v958, %v950
    %v963 = vmul.f32 %v738, %v959
    %v964 = vmul.f32 %v739, %v960
    %v965 = vmul.f32 %v740, %v961
    %v966 = vmul.f32 %v741, %v962
    %v967 = vld [vmem:[%s6] sm:$0xff]
    %v968 = vld [vmem:[%s6 + $0x8] sm:$0xff]
    %v969 = vld [vmem:[%s6 + $0x10] sm:$0xff]
    %v970 = vld [vmem:[%s6 + $0x18] sm:$0xff]
    %v971 = vld [vmem:[%s6 + $0x20] sm:$0xff]
    %v972 = vld [vmem:[%s6 + $0x28] sm:$0xff]
    %v973 = vld [vmem:[%s6 + $0x30] sm:$0xff]
    %v974 = vld [vmem:[%s6 + $0x38] sm:$0xff]
    %v975 = vld [vmem:[%s6 + $0x40] sm:$0xff]
    %v976 = vld [vmem:[%s6 + $0x48] sm:$0xff]
    %v977 = vld [vmem:[%s6 + $0x50] sm:$0xff]
    %v978 = vld [vmem:[%s6 + $0x58] sm:$0xff]
    %v979 = vld [vmem:[%s6 + $0x60] sm:$0xff]
    %v980 = vld [vmem:[%s6 + $0x68] sm:$0xff]
    %v981 = vld [vmem:[%s6 + $0x70] sm:$0xff]
    %v982 = vld [vmem:[%s6 + $0x78] sm:$0xff]
    %983 = vmatprep.subr.mxu0 0.0
    %984 = vmatpush1.msra.mxu0 %v967
    %985 = vmatprep.subr.mxu0 0.0
    %986 = vmatpush1.msra.mxu0 %v968
    %987 = vmatprep.subr.mxu0 0.0
    %988 = vmatpush1.msra.mxu0 %v969
    %989 = vmatprep.subr.mxu0 0.0
    %990 = vmatpush1.msra.mxu0 %v970
    %991 = vmatprep.subr.mxu0 0.0
    %992 = vmatpush1.msra.mxu0 %v971
    %993 = vmatprep.subr.mxu0 0.0
    %994 = vmatpush1.msra.mxu0 %v972
    %995 = vmatprep.subr.mxu0 0.0
    %996 = vmatpush1.msra.mxu0 %v973
    %997 = vmatprep.subr.mxu0 0.0
    %998 = vmatpush1.msra.mxu0 %v974
    %999 = vmatprep.subr.mxu0 0.0
    %1000 = vmatpush1.msra.mxu0 %v975
    %1001 = vmatprep.subr.mxu0 0.0
    %1002 = vmatpush1.msra.mxu0 %v976
    %1003 = vmatprep.subr.mxu0 0.0
    %1004 = vmatpush1.msra.mxu0 %v977
    %1005 = vmatprep.subr.mxu0 0.0
    %1006 = vmatpush1.msra.mxu0 %v978
    %1007 = vmatprep.subr.mxu0 0.0
    %1008 = vmatpush1.msra.mxu0 %v979
    %1009 = vmatprep.subr.mxu0 0.0
    %1010 = vmatpush1.msra.mxu0 %v980
    %1011 = vmatprep.subr.mxu0 0.0
    %1012 = vmatpush1.msra.mxu0 %v981
    %1013 = vmatprep.subr.mxu0 0.0
    %1014 = vmatpush1.msra.mxu0 %v982
    %1015 = vmatprep.subr.mxu0 0.0
    %1016 = vmatpush1.msra.mxu0 0.0
    %1017 = vmatprep.subr.mxu0 0.0
    %1018 = vmatpush1.msra.mxu0 0.0
    %1019 = vmatprep.subr.mxu0 0.0
    %1020 = vmatpush1.msra.mxu0 0.0
    %1021 = vmatprep.subr.mxu0 0.0
    %1022 = vmatpush1.msra.mxu0 0.0
    %1023 = vmatprep.subr.mxu0 0.0
    %1024 = vmatpush1.msra.mxu0 0.0
    %1025 = vmatprep.subr.mxu0 0.0
    %1026 = vmatpush1.msra.mxu0 0.0
    %1027 = vmatprep.subr.mxu0 0.0
    %1028 = vmatpush1.msra.mxu0 0.0
    %1029 = vmatprep.subr.mxu0 0.0
    %1030 = vmatpush1.msra.mxu0 0.0
    %1031 = vmatprep.subr.mxu0 0.0
    %1032 = vmatpush1.msra.mxu0 0.0
    %1033 = vmatprep.subr.mxu0 0.0
    %1034 = vmatpush1.msra.mxu0 0.0
    %1035 = vmatprep.subr.mxu0 0.0
    %1036 = vmatpush1.msra.mxu0 0.0
    %1037 = vmatprep.subr.mxu0 0.0
    %1038 = vmatpush1.msra.mxu0 0.0
    %1039 = vmatprep.subr.mxu0 0.0
    %1040 = vmatpush1.msra.mxu0 0.0
    %1041 = vmatprep.subr.mxu0 0.0
    %1042 = vmatpush1.msra.mxu0 0.0
    %1043 = vmatprep.subr.mxu0 0.0
    %1044 = vmatpush1.msra.mxu0 0.0
    %1045 = vmatprep.subr.mxu0 0.0
    %1046 = vmatpush1.msra.mxu0 0.0
    %1047 = vmatprep.mubr.f32.mxu0 0.0
    %1048 = vmatmul.mubr.f32.gmra.mrb[0].mxu0 %v963
    %v1049 = vpop.f32.mrb[0].mxu0
    %v1050 = vadd.f32 0.0, %v1049
    %v1051 = vpop.f32.mrb[0].mxu0
    %1052 = vmatprep.mubr.f32.mxu0 0.0
    %1053 = vmatmul.mubr.f32.gmra.mrb[0].mxu0 %v964
    %v1054 = vpop.f32.mrb[0].mxu0
    %v1055 = vadd.f32 0.0, %v1054
    %v1056 = vpop.f32.mrb[0].mxu0
    %1057 = vmatprep.mubr.f32.mxu0 0.0
    %1058 = vmatmul.mubr.f32.gmra.mrb[0].mxu0 %v965
    %v1059 = vpop.f32.mrb[0].mxu0
    %v1060 = vadd.f32 0.0, %v1059
    %v1061 = vpop.f32.mrb[0].mxu0
    %1062 = vmatprep.mubr.f32.mxu0 0.0
    %1063 = vmatmul.mubr.f32.gmra.mrb[0].mxu0 %v966
    %v1064 = vpop.f32.mrb[0].mxu0
    %v1065 = vadd.f32 0.0, %v1064
    %v1066 = vpop.f32.mrb[0].mxu0
    %1067 = vdwg.mxu0
    %v1068 = vsel %vm155, %v1050, 0.0
    %v1069 = vsel %vm155, %v1055, 0.0
    %v1070 = vadd.f32 %v1068, %v1069
    %v1071 = vsel %vm155, %v1060, 0.0
    %v1072 = vadd.f32 %v1070, %v1071
    %v1073 = vsel %vm155, %v1065, 0.0
    %v1074 = vadd.f32 %v1072, %v1073
    %v1075 = vrot.slane %v1074, 4
    %v1076 = vadd.f32 %v1074, %v1075
    %v1077 = vrot.slane %v1076, 2
    %v1078 = vadd.f32 %v1076, %v1077
    %v1079 = vrot.slane %v1078, 1
    %v1080 = vadd.f32 %v1078, %v1079
    %v1081 = vmul.f32 %v1050, %v1050
    %v1082 = vmul.f32 %v1055, %v1055
    %v1083 = vmul.f32 %v1060, %v1060
    %v1084 = vmul.f32 %v1065, %v1065
    %v1085 = vsel %vm155, %v1081, 0.0
    %v1086 = vsel %vm155, %v1082, 0.0
    %v1087 = vadd.f32 %v1085, %v1086
    %v1088 = vsel %vm155, %v1083, 0.0
    %v1089 = vadd.f32 %v1087, %v1088
    %v1090 = vsel %vm155, %v1084, 0.0
    %v1091 = vadd.f32 %v1089, %v1090
    %v1092 = vrot.slane %v1091, 4
    %v1093 = vadd.f32 %v1091, %v1092
    %v1094 = vrot.slane %v1093, 2
    %v1095 = vadd.f32 %v1093, %v1094
    %v1096 = vrot.slane %v1095, 1
    %v1097 = vadd.f32 %v1095, %v1096
    %v1098 = vsel %vm277, %v1097, %v1080
    %v1100 = vsel %vm155, %v1098, 0
    %1102 = vmatprep.subr.mxu0 0.0
    %1103 = vmatpush1.msra.mxu0 %v135
    %1104 = vmatprep.subr.mxu0 0.0
    %1105 = vmatpush1.msra.mxu0 %v136
    %1106 = vmatprep.subr.mxu0 0.0
    %1107 = vmatpush1.msra.mxu0 %v137
    %1108 = vmatprep.subr.mxu0 0.0
    %1109 = vmatpush1.msra.mxu0 %v138
    %1110 = vmatprep.subr.mxu0 0.0
    %1111 = vmatpush1.msra.mxu0 %v139
    %1112 = vmatprep.subr.mxu0 0.0
    %1113 = vmatpush1.msra.mxu0 %v140
    %1114 = vmatprep.subr.mxu0 0.0
    %1115 = vmatpush1.msra.mxu0 %v141
    %1116 = vmatprep.subr.mxu0 0.0
    %1117 = vmatpush1.msra.mxu0 %v142
    %1118 = vmatprep.subr.mxu0 0.0
    %1119 = vmatpush1.msra.mxu0 0.0
    %1120 = vmatprep.subr.mxu0 0.0
    %1121 = vmatpush1.msra.mxu0 0.0
    %1122 = vmatprep.subr.mxu0 0.0
    %1123 = vmatpush1.msra.mxu0 0.0
    %1124 = vmatprep.subr.mxu0 0.0
    %1125 = vmatpush1.msra.mxu0 0.0
    %1126 = vmatprep.subr.mxu0 0.0
    %1127 = vmatpush1.msra.mxu0 0.0
    %1128 = vmatprep.subr.mxu0 0.0
    %1129 = vmatpush1.msra.mxu0 0.0
    %1130 = vmatprep.subr.mxu0 0.0
    %1131 = vmatpush1.msra.mxu0 0.0
    %1132 = vmatprep.subr.mxu0 0.0
    %1133 = vmatpush1.msra.mxu0 0.0
    %1134 = vmatprep.subr.mxu0 0.0
    %1135 = vmatpush1.msra.mxu0 0.0
    %1136 = vmatprep.subr.mxu0 0.0
    %1137 = vmatpush1.msra.mxu0 0.0
    %1138 = vmatprep.subr.mxu0 0.0
    %1139 = vmatpush1.msra.mxu0 0.0
    %1140 = vmatprep.subr.mxu0 0.0
    %1141 = vmatpush1.msra.mxu0 0.0
    %1142 = vmatprep.subr.mxu0 0.0
    %1143 = vmatpush1.msra.mxu0 0.0
    %1144 = vmatprep.subr.mxu0 0.0
    %1145 = vmatpush1.msra.mxu0 0.0
    %1146 = vmatprep.subr.mxu0 0.0
    %1147 = vmatpush1.msra.mxu0 0.0
    %1148 = vmatprep.subr.mxu0 0.0
    %1149 = vmatpush1.msra.mxu0 0.0
    %1150 = vmatprep.subr.mxu0 0.0
    %1151 = vmatpush1.msra.mxu0 0.0
    %1152 = vmatprep.subr.mxu0 0.0
    %1153 = vmatpush1.msra.mxu0 0.0
    %1154 = vmatprep.subr.mxu0 0.0
    %1155 = vmatpush1.msra.mxu0 0.0
    %1156 = vmatprep.subr.mxu0 0.0
    %1157 = vmatpush1.msra.mxu0 0.0
    %1158 = vmatprep.subr.mxu0 0.0
    %1159 = vmatpush1.msra.mxu0 0.0
    %1160 = vmatprep.subr.mxu0 0.0
    %1161 = vmatpush1.msra.mxu0 0.0
    %1162 = vmatprep.subr.mxu0 0.0
    %1163 = vmatpush1.msra.mxu0 0.0
    %1164 = vmatprep.subr.mxu0 0.0
    %1165 = vmatpush1.msra.mxu0 0.0
    %1166 = vmatprep.mubr.f32.mxu0 0.0
    %1167 = vmatmul.mubr.f32.gmra.mrb[0].mxu0 %v1100
    %v1168 = vpop.f32.mrb[0].mxu0
    %v1169 = vadd.f32 0.0, %v1168
    %v1170 = vpop.f32.mrb[0].mxu0
    %1171 = vdwg.mxu0
    %v1172 = vmul.f32 %v1169, 0.001953125
    %v1173 = vmul.f32 %v1172, %v1172
    %v1175 = vrot.slane %v1173, 7
    %v1177 = vsub.f32 %v1172, %v1175
    %v1178 = vmax.f32 %v1177, 0.0
    %v1179 = vadd.f32 %v1178, 1e-05
    %v1180 = vrsqrt.pop %v1179
    %v1182 = vrot.slane %v1180, 3
    %v1184 = vmul.f32 %v118, %v1182
    %v1185 = vlaneseq
    %v1186 = vshrl.u32 %v1185, 7
    %v1187 = vsub.s32 6, %v1186
    %v1188 = vrot.slane %v1184, %v1187
    %v1189 = vmul.f32 %v1050, %v1188
    %v1190 = vmul.f32 %v1055, %v1188
    %v1191 = vmul.f32 %v1060, %v1188
    %v1192 = vmul.f32 %v1065, %v1188
    %v1194 = vrot.slane %v1184, 6
    %v1196 = vmul.f32 %v1172, %v1194
    %v1198 = vrot.slane %v1196, 1
    %v1200 = vsub.f32 %v118, %v1198
    %v1201 = vlaneseq
    %v1202 = vshrl.u32 %v1201, 7
    %v1203 = vsub.s32 7, %v1202
    %v1204 = vrot.slane %v1200, %v1203
    %v1205 = vadd.f32 %v1189, %v1204
    %v1206 = vadd.f32 %v1190, %v1204
    %v1207 = vadd.f32 %v1191, %v1204
    %v1208 = vadd.f32 %v1192, %v1204
    %v1209 = vadd.f32 %v1205, %v143
    %v1210 = vadd.f32 %v1206, %v144
    %v1211 = vadd.f32 %v1207, %v145
    %v1212 = vadd.f32 %v1208, %v146
    %1213 = vst.msk [vmem:[#allocation13] sm:$0xff] %vm155, %v1209
    %1214 = vst.msk [vmem:[#allocation13 + $0x8] sm:$0xff] %vm155, %v1210
    %1215 = vst.msk [vmem:[#allocation13 + $0x10] sm:$0xff] %vm155, %v1211
    %1216 = vst.msk [vmem:[#allocation13 + $0x18] sm:$0xff] %vm155, %v1212
    // Predicated region
    $region66: #{tpu_custom_call.1} parent=1 // pred_check
      _
    $region67: #{tpu_custom_call.1} parent=1 // pred_check_branch
      %1218 = sbr.rel (0) target = $region69
    $region68: #{tpu_custom_call.1} parent=1 // pred_region
      %s1220 = ssub.s32 512, 512
      %1221 = vsyncadd [#allocation4], %s1220
      %s1222 = sshll.u32 [#allocation13], 4
      %s1223 = int_to_ptr.vmem [resolvable:$true] %s1222
      %1228 = dma.vmem_to_hbm [thread:$0]  %s1223, 512, %s10, [#allocation4], 128, 128, 8
    $region69: #{tpu_custom_call.1} parent=1 // pred_fallthru
      _
    // Predicated region
    $region70: #{tpu_custom_call.1} parent=1 // pred_check
      _
    $region71: #{tpu_custom_call.1} parent=1 // pred_check_branch
      %1230 = sbr.rel (0) target = $region73
    $region72: #{tpu_custom_call.1} parent=1 // pred_region
      %1231 = dma.done [#allocation4], 512
    $region73: #{tpu_custom_call.1} parent=1 // pred_fallthru
      _
    %1232 = vsyncpa [#allocation3], 1
    %1233 = vsyncpa [#allocation6], 1
    %1234 = vsyncpa [#allocation9], 1
    %1235 = vsyncpa [#allocation12], 1
    %1236 = vsyncpa [#allocation4], 1

</llo_original>
